<compile_context>
chip_gen: v7x
topology: tpu7x:2x2x1
jax: 0.10.0
libtpu: 0.0.40
codegen_flags: <defaults>
</compile_context>

<pallas_src>
import math

import jax
import jax.numpy as jnp
from jax import lax
from jax.experimental import pallas as pl
from jax.experimental.pallas import tpu as pltpu

EPS = 0.003
HIDDEN = 512
LANE = 128


def _round_up(x, m):
    return (x + m - 1) // m * m


def _choose_tile_b(batch):
    """Batch tile: big enough to amortize per-grid-step overhead, small enough to keep
    >= 2 grid steps (v7x has 2 TensorCores) once the batch is large enough."""
    if batch < 512:
        # Small batch: a single grid step, rounded to the sublane granule.
        return _round_up(max(batch, 8), 8)
    # Large batch: multiples of 256, capped at 1024, and at least 2 grid steps.
    tile = min(1024, _round_up(batch, 256) // 2)
    tile = max(256, tile // 256 * 256)
    return tile


def _actor_kernel(limits_ref, state_ref, w1_ref, b1_ref, w2_ref, b2_ref,
                  w3_ref, b3_ref, out_ref):
    # limits_ref: SMEM (2,) f32 -> [action_limit_v, action_limit_w]
    lim_v = limits_ref[0]
    lim_w = limits_ref[1]

    # fa1 + relu  (bf16 matmul operands, f32 accumulate / f32 elementwise)
    x = state_ref[...].astype(jnp.bfloat16)
    h1 = jnp.dot(x, w1_ref[...], preferred_element_type=jnp.float32) + b1_ref[...]
    h1 = jnp.maximum(h1, 0.0)

    # fa2 + relu
    h2 = jnp.dot(h1.astype(jnp.bfloat16), w2_ref[...],
                 preferred_element_type=jnp.float32) + b2_ref[...]
    h2 = jnp.maximum(h2, 0.0)

    # fa3 (lane-padded to 128 output columns; padding is zero weights/bias)
    a = jnp.dot(h2.astype(jnp.bfloat16), w3_ref[...],
                preferred_element_type=jnp.float32) + b3_ref[...]

    # column 0 -> sigmoid * v, column 1 -> tanh * w, remaining columns pass through
    # unchanged (matches PyTorch; padded columns are sliced off by the wrapper).
    # Single EUP pass: sigmoid(a) = 0.5*tanh(0.5*a) + 0.5, so one tanh over the tile
    # (input pre-scaled per column on the VPU) instead of exp + recip + tanh.
    col = lax.broadcasted_iota(jnp.int32, a.shape, 1)
    t = jnp.tanh(jnp.where(col == 0, 0.5 * a, a))
    out = jnp.where(col == 0, (0.5 * t + 0.5) * lim_v,
                    jnp.where(col == 1, t * lim_w, a))
    out_ref[...] = out.astype(out_ref.dtype)


def init_actor_params(key, state_dim, action_dim):
    """f32 parameters mirroring the PyTorch init scheme.
    fa1/fa2 weights ~ U(-1/sqrt(fan), 1/sqrt(fan)) with fan = weight.size()[0] = 512
    (faithfully mirroring the original fanin_init call); fa3 weight ~ U(-EPS, EPS);
    biases keep PyTorch Linear default U(-1/sqrt(in_features), 1/sqrt(in_features)).
    Weights stored transposed: [in, out]."""
    k1, k2, k3, kb1, kb2, kb3 = jax.random.split(key, 6)

    v1 = 1.0 / math.sqrt(HIDDEN)
    w1 = jax.random.uniform(k1, (state_dim, HIDDEN), jnp.float32, -v1, v1)
    bb1 = 1.0 / math.sqrt(state_dim)
    b1 = jax.random.uniform(kb1, (1, HIDDEN), jnp.float32, -bb1, bb1)

    v2 = 1.0 / math.sqrt(HIDDEN)
    w2 = jax.random.uniform(k2, (HIDDEN, HIDDEN), jnp.float32, -v2, v2)
    bb2 = 1.0 / math.sqrt(HIDDEN)
    b2 = jax.random.uniform(kb2, (1, HIDDEN), jnp.float32, -bb2, bb2)

    w3 = jax.random.uniform(k3, (HIDDEN, action_dim), jnp.float32, -EPS, EPS)
    bb3 = 1.0 / math.sqrt(HIDDEN)
    b3 = jax.random.uniform(kb3, (1, action_dim), jnp.float32, -bb3, bb3)

    return (w1, b1, w2, b2, w3, b3)


def prepare_kernel_params(params, action_dim):
    """Cast weights to bf16 and zero-pad the last layer to a 128-lane-wide output."""
    w1, b1, w2, b2, w3, b3 = params
    act_pad = _round_up(max(action_dim, LANE), LANE)
    w3p = jnp.zeros((HIDDEN, act_pad), jnp.float32).at[:, :action_dim].set(w3)
    b3p = jnp.zeros((1, act_pad), jnp.float32).at[:, :action_dim].set(b3)
    return (w1.astype(jnp.bfloat16), b1,
            w2.astype(jnp.bfloat16), b2,
            w3p.astype(jnp.bfloat16), b3p,
            action_dim)


def _make_in_specs(tile_b, state_dim, act_pad, single_buffer_weights):
    const = lambda i: (0, 0)  # weights/biases stay VMEM-resident across grid steps

    def wspec(shape):
        if single_buffer_weights:
            # Constant index_map -> no re-DMA; single-buffer to save VMEM/bookkeeping.
            return pl.BlockSpec(shape, const, pipeline_mode=pl.Buffered(1))
        return pl.BlockSpec(shape, const)

    return [
        pl.BlockSpec(memory_space=pltpu.MemorySpace.SMEM),       # limits (2,) f32
        pl.BlockSpec((tile_b, state_dim), lambda i: (i, 0)),     # state tile
        wspec((state_dim, HIDDEN)),                              # w1 (bf16)
        wspec((1, HIDDEN)),                                      # b1 (f32)
        wspec((HIDDEN, HIDDEN)),                                 # w2 (bf16)
        wspec((1, HIDDEN)),                                      # b2 (f32)
        wspec((HIDDEN, act_pad)),                                # w3 padded (bf16)
        wspec((1, act_pad)),                                     # b3 padded (f32)
    ]


def actor_forward(state, kernel_params, action_limit_v, action_limit_w):
    """state: [B, state_dim] f32, or [state_dim] f32 (the PyTorch 1-D branch)."""
    w1, b1, w2, b2, w3p, b3p, action_dim = kernel_params

    squeeze = state.ndim == 1
    if squeeze:
        state = state[None, :]
    B, state_dim = state.shape
    act_pad = w3p.shape[1]

    tile_b = _choose_tile_b(B)
    padded_b = _round_up(B, tile_b)
    if padded_b != B:
        state = jnp.pad(state, ((0, padded_b - B), (0, 0)))

    limits = jnp.array([action_limit_v, action_limit_w], jnp.float32)

    def run(single_buffer_weights):
        return pl.pallas_call(
            _actor_kernel,
            # bf16 output halves kernel writeback and the wrapper-slice read.
            out_shape=jax.ShapeDtypeStruct((padded_b, act_pad), jnp.bfloat16),
            grid=(padded_b // tile_b,),
            in_specs=_make_in_specs(tile_b, state_dim, act_pad,
                                    single_buffer_weights),
            out_specs=pl.BlockSpec((tile_b, act_pad), lambda i: (i, 0)),
            compiler_params=pltpu.CompilerParams(
                dimension_semantics=("parallel",)),
        )(limits, state, w1, b1, w2, b2, w3p, b3p)

    try:
        out = run(single_buffer_weights=True)
    except Exception:
        # Fallback if this JAX build rejects pl.Buffered(1); default double-buffering.
        out = run(single_buffer_weights=False)

    out = out[:B, :action_dim].astype(jnp.float32)
    if squeeze:
        out = out[0]
    return out


def actor_reference(state, kernel_params, action_limit_v, action_limit_w):
    """Pure-JAX reference using the same bf16 weights / f32 accumulation as the kernel."""
    w1, b1, w2, b2, w3p, b3p, action_dim = kernel_params
    h1 = jnp.maximum(
        jnp.dot(state.astype(jnp.bfloat16), w1,
                preferred_element_type=jnp.float32) + b1, 0.0)
    h2 = jnp.maximum(
        jnp.dot(h1.astype(jnp.bfloat16), w2,
                preferred_element_type=jnp.float32) + b2, 0.0)
    a = (jnp.dot(h2.astype(jnp.bfloat16), w3p,
                 preferred_element_type=jnp.float32) + b3p)[:, :action_dim]
    a0 = jax.nn.sigmoid(a[:, 0]) * action_limit_v
    a1 = jnp.tanh(a[:, 1]) * action_limit_w
    return a.at[:, 0].set(a0).at[:, 1].set(a1)


if __name__ == "__main__":
    state_dim = 14      # matches the `state.shape == [14]` convention of the module
    action_dim = 2
    action_limit_v = 0.22
    action_limit_w = 2.0
    batch = 8

    key = jax.random.PRNGKey(0)
    pkey, skey, skey2 = jax.random.split(key, 3)
    params_f32 = init_actor_params(pkey, state_dim, action_dim)
    kparams = prepare_kernel_params(params_f32, action_dim)
    state = jax.random.normal(skey, (batch, state_dim), jnp.float32)

    # Small-batch path (single grid step).
    out = actor_forward(state, kparams, action_limit_v, action_limit_w)
    out = jax.block_until_ready(out)
    ref = actor_reference(state, kparams, action_limit_v, action_limit_w)
    assert out.shape == (batch, action_dim)
    assert jnp.allclose(out, ref, atol=2e-3, rtol=2e-2), "mismatch vs reference"

    # The 1-D (single-state) PyTorch branch: same kernel, batch padded to one tile.
    out1 = actor_forward(state[0], kparams, action_limit_v, action_limit_w)
    out1 = jax.block_until_ready(out1)
    assert out1.shape == (action_dim,)
    assert jnp.allclose(out1, ref[0], atol=2e-3, rtol=2e-2), "1-D branch mismatch"

    # Medium-batch path: exercises the 256-row tiles / multi-step "parallel" grid
    # (batch 520 -> padded 768, 3 grid steps) with batch padding sliced off.
    state_big = jax.random.normal(skey2, (520, state_dim), jnp.float32)
    out_big = actor_forward(state_big, kparams, action_limit_v, action_limit_w)
    out_big = jax.block_until_ready(out_big)
    ref_big = actor_reference(state_big, kparams, action_limit_v, action_limit_w)
    assert out_big.shape == (520, action_dim)
    assert jnp.allclose(out_big, ref_big, atol=2e-3, rtol=2e-2), "tiled-batch mismatch"

    print("KERNEL_OK")
</pallas_src>

<mosaic_0001>
module attributes {stable_mosaic.version = 11 : i64} {
  func.func @_actor_kernel(%arg0: i32, %arg1: memref<2xf32, #tpu.memory_space<smem>>, %arg2: memref<8x14xf32, #tpu.memory_space<vmem>>, %arg3: memref<14x512xbf16, #tpu.memory_space<vmem>>, %arg4: memref<1x512xf32, #tpu.memory_space<vmem>>, %arg5: memref<512x512xbf16, #tpu.memory_space<vmem>>, %arg6: memref<1x512xf32, #tpu.memory_space<vmem>>, %arg7: memref<512x128xbf16, #tpu.memory_space<vmem>>, %arg8: memref<1x128xf32, #tpu.memory_space<vmem>>, %arg9: memref<8x128xbf16, #tpu.memory_space<vmem>>) attributes {dimension_semantics = [#tpu.dimension_semantics<parallel>], iteration_bounds = array<i64: 1>, scalar_prefetch = 0 : i64, scratch_operands = 0 : i64, tpu.core_type = #tpu.core_type<tc>, window_params = [{transform_indices = @transform_0, window_bounds = array<i64: 2>}, {transform_indices = @transform_1, window_bounds = array<i64: 8, 14>}, {pipeline_mode = #tpu.pipeline_mode<synchronous>, transform_indices = @transform_2, window_bounds = array<i64: 14, 512>}, {pipeline_mode = #tpu.pipeline_mode<synchronous>, transform_indices = @transform_3, window_bounds = array<i64: 1, 512>}, {pipeline_mode = #tpu.pipeline_mode<synchronous>, transform_indices = @transform_4, window_bounds = array<i64: 512, 512>}, {pipeline_mode = #tpu.pipeline_mode<synchronous>, transform_indices = @transform_5, window_bounds = array<i64: 1, 512>}, {pipeline_mode = #tpu.pipeline_mode<synchronous>, transform_indices = @transform_6, window_bounds = array<i64: 512, 128>}, {pipeline_mode = #tpu.pipeline_mode<synchronous>, transform_indices = @transform_7, window_bounds = array<i64: 1, 128>}, {transform_indices = @transform_8, window_bounds = array<i64: 8, 128>}]} {
    %c0 = arith.constant 0 : index
    %0 = memref.load %arg1[%c0] : memref<2xf32, #tpu.memory_space<smem>>
    %c1 = arith.constant 1 : index
    %1 = memref.load %arg1[%c1] : memref<2xf32, #tpu.memory_space<smem>>
    %c0_0 = arith.constant 0 : index
    %c0_1 = arith.constant 0 : index
    %2 = vector.load %arg2[%c0_0, %c0_1] : memref<8x14xf32, #tpu.memory_space<vmem>>, vector<8x14xf32>
    %3 = arith.truncf %2 : vector<8x14xf32> to vector<8x14xbf16>
    %c0_2 = arith.constant 0 : index
    %c0_3 = arith.constant 0 : index
    %4 = vector.load %arg3[%c0_2, %c0_3] : memref<14x512xbf16, #tpu.memory_space<vmem>>, vector<14x512xbf16>
    %cst = arith.constant dense<0.000000e+00> : vector<8x512xf32>
    %5 = tpu.matmul %3, %4, %cst {dimension_numbers = #tpu.dot_dimension_numbers<[1], [0], [0], [1], [0, 0, 1, 1], [], []>} : vector<8x14xbf16>, vector<14x512xbf16>, vector<8x512xf32> -> vector<8x512xf32>
    %c0_4 = arith.constant 0 : index
    %c0_5 = arith.constant 0 : index
    %6 = vector.load %arg4[%c0_4, %c0_5] : memref<1x512xf32, #tpu.memory_space<vmem>>, vector<1x512xf32>
    %7 = vector.broadcast %6 : vector<1x512xf32> to vector<8x512xf32>
    %8 = arith.addf %5, %7 : vector<8x512xf32>
    %cst_6 = arith.constant 0.000000e+00 : f32
    %9 = vector.broadcast %cst_6 : f32 to vector<8x512xf32>
    %10 = arith.maximumf %8, %9 : vector<8x512xf32>
    %11 = arith.truncf %10 : vector<8x512xf32> to vector<8x512xbf16>
    %c0_7 = arith.constant 0 : index
    %c0_8 = arith.constant 0 : index
    %12 = vector.load %arg5[%c0_7, %c0_8] : memref<512x512xbf16, #tpu.memory_space<vmem>>, vector<512x512xbf16>
    %cst_9 = arith.constant dense<0.000000e+00> : vector<8x512xf32>
    %13 = tpu.matmul %11, %12, %cst_9 {dimension_numbers = #tpu.dot_dimension_numbers<[1], [0], [0], [1], [0, 0, 1, 1], [], []>} : vector<8x512xbf16>, vector<512x512xbf16>, vector<8x512xf32> -> vector<8x512xf32>
    %c0_10 = arith.constant 0 : index
    %c0_11 = arith.constant 0 : index
    %14 = vector.load %arg6[%c0_10, %c0_11] : memref<1x512xf32, #tpu.memory_space<vmem>>, vector<1x512xf32>
    %15 = vector.broadcast %14 : vector<1x512xf32> to vector<8x512xf32>
    %16 = arith.addf %13, %15 : vector<8x512xf32>
    %cst_12 = arith.constant 0.000000e+00 : f32
    %17 = vector.broadcast %cst_12 : f32 to vector<8x512xf32>
    %18 = arith.maximumf %16, %17 : vector<8x512xf32>
    %19 = arith.truncf %18 : vector<8x512xf32> to vector<8x512xbf16>
    %c0_13 = arith.constant 0 : index
    %c0_14 = arith.constant 0 : index
    %20 = vector.load %arg7[%c0_13, %c0_14] : memref<512x128xbf16, #tpu.memory_space<vmem>>, vector<512x128xbf16>
    %cst_15 = arith.constant dense<0.000000e+00> : vector<8x128xf32>
    %21 = tpu.matmul %19, %20, %cst_15 {dimension_numbers = #tpu.dot_dimension_numbers<[1], [0], [0], [1], [0, 0, 1, 1], [], []>} : vector<8x512xbf16>, vector<512x128xbf16>, vector<8x128xf32> -> vector<8x128xf32>
    %c0_16 = arith.constant 0 : index
    %c0_17 = arith.constant 0 : index
    %22 = vector.load %arg8[%c0_16, %c0_17] : memref<1x128xf32, #tpu.memory_space<vmem>>, vector<1x128xf32>
    %23 = vector.broadcast %22 : vector<1x128xf32> to vector<8x128xf32>
    %24 = arith.addf %21, %23 : vector<8x128xf32>
    %25 = tpu.iota {dimensions = array<i32: 1>} : vector<8x128xi32>
    %c0_i32 = arith.constant 0 : i32
    %26 = vector.broadcast %c0_i32 : i32 to vector<8x128xi32>
    %27 = arith.cmpi eq, %25, %26 : vector<8x128xi32>
    %cst_18 = arith.constant 5.000000e-01 : f32
    %28 = vector.broadcast %cst_18 : f32 to vector<8x128xf32>
    %29 = arith.mulf %28, %24 : vector<8x128xf32>
    %30 = arith.select %27, %29, %24 : vector<8x128xi1>, vector<8x128xf32>
    %31 = math.tanh %30 : vector<8x128xf32>
    %c0_i32_19 = arith.constant 0 : i32
    %32 = vector.broadcast %c0_i32_19 : i32 to vector<8x128xi32>
    %33 = arith.cmpi eq, %25, %32 : vector<8x128xi32>
    %cst_20 = arith.constant 5.000000e-01 : f32
    %34 = vector.broadcast %cst_20 : f32 to vector<8x128xf32>
    %35 = arith.mulf %34, %31 : vector<8x128xf32>
    %cst_21 = arith.constant 5.000000e-01 : f32
    %36 = vector.broadcast %cst_21 : f32 to vector<8x128xf32>
    %37 = arith.addf %35, %36 : vector<8x128xf32>
    %38 = vector.broadcast %0 : f32 to vector<8x128xf32>
    %39 = arith.mulf %37, %38 : vector<8x128xf32>
    %c1_i32 = arith.constant 1 : i32
    %40 = vector.broadcast %c1_i32 : i32 to vector<8x128xi32>
    %41 = arith.cmpi eq, %25, %40 : vector<8x128xi32>
    %42 = vector.broadcast %1 : f32 to vector<8x128xf32>
    %43 = arith.mulf %31, %42 : vector<8x128xf32>
    %44 = arith.select %41, %43, %24 : vector<8x128xi1>, vector<8x128xf32>
    %45 = arith.select %33, %39, %44 : vector<8x128xi1>, vector<8x128xf32>
    %46 = arith.truncf %45 : vector<8x128xf32> to vector<8x128xbf16>
    %c0_22 = arith.constant 0 : index
    %c0_23 = arith.constant 0 : index
    %47 = vector.load %arg9[%c0_22, %c0_23] : memref<8x128xbf16, #tpu.memory_space<vmem>>, vector<8x128xbf16>
    tpu.vector_store %arg9[%c0_22, %c0_23], %46 {strides = array<i32>} : memref<8x128xbf16, #tpu.memory_space<vmem>>, vector<8x128xbf16>,
    return
  }
  func.func @transform_0(%arg0: i32) -> i32 {
    %c0_i32 = arith.constant 0 : i32
    %c0_i32_0 = arith.constant 0 : i32
    return %c0_i32 : i32
  }
  func.func @transform_1(%arg0: i32) -> (i32, i32) {
    %c0_i32 = arith.constant 0 : i32
    %c0_i32_0 = arith.constant 0 : i32
    return %arg0, %c0_i32 : i32, i32
  }
  func.func @transform_2(%arg0: i32) -> (i32, i32) {
    %c0_i32 = arith.constant 0 : i32
    %c0_i32_0 = arith.constant 0 : i32
    %c0_i32_1 = arith.constant 0 : i32
    return %c0_i32, %c0_i32_0 : i32, i32
  }
  func.func @transform_3(%arg0: i32) -> (i32, i32) {
    %c0_i32 = arith.constant 0 : i32
    %c0_i32_0 = arith.constant 0 : i32
    %c0_i32_1 = arith.constant 0 : i32
    return %c0_i32, %c0_i32_0 : i32, i32
  }
  func.func @transform_4(%arg0: i32) -> (i32, i32) {
    %c0_i32 = arith.constant 0 : i32
    %c0_i32_0 = arith.constant 0 : i32
    %c0_i32_1 = arith.constant 0 : i32
    return %c0_i32, %c0_i32_0 : i32, i32
  }
  func.func @transform_5(%arg0: i32) -> (i32, i32) {
    %c0_i32 = arith.constant 0 : i32
    %c0_i32_0 = arith.constant 0 : i32
    %c0_i32_1 = arith.constant 0 : i32
    return %c0_i32, %c0_i32_0 : i32, i32
  }
  func.func @transform_6(%arg0: i32) -> (i32, i32) {
    %c0_i32 = arith.constant 0 : i32
    %c0_i32_0 = arith.constant 0 : i32
    %c0_i32_1 = arith.constant 0 : i32
    return %c0_i32, %c0_i32_0 : i32, i32
  }
  func.func @transform_7(%arg0: i32) -> (i32, i32) {
    %c0_i32 = arith.constant 0 : i32
    %c0_i32_0 = arith.constant 0 : i32
    %c0_i32_1 = arith.constant 0 : i32
    return %c0_i32, %c0_i32_0 : i32, i32
  }
  func.func @transform_8(%arg0: i32) -> (i32, i32) {
    %c0_i32 = arith.constant 0 : i32
    %c0_i32_0 = arith.constant 0 : i32
    return %arg0, %c0_i32 : i32, i32
  }
}

module attributes {stable_mosaic.version = 11 : i64} {
  func.func @_actor_kernel(%arg0: i32, %arg1: memref<2xf32, #tpu.memory_space<smem>>, %arg2: memref<8x14xf32, #tpu.memory_space<vmem>>, %arg3: memref<14x512xbf16, #tpu.memory_space<vmem>>, %arg4: memref<1x512xf32, #tpu.memory_space<vmem>>, %arg5: memref<512x512xbf16, #tpu.memory_space<vmem>>, %arg6: memref<1x512xf32, #tpu.memory_space<vmem>>, %arg7: memref<512x128xbf16, #tpu.memory_space<vmem>>, %arg8: memref<1x128xf32, #tpu.memory_space<vmem>>, %arg9: memref<8x128xbf16, #tpu.memory_space<vmem>>) attributes {dimension_semantics = [#tpu.dimension_semantics<parallel>], iteration_bounds = array<i64: 1>, scalar_prefetch = 0 : i64, scratch_operands = 0 : i64, tpu.core_type = #tpu.core_type<tc>, window_params = [{transform_indices = @transform_0, window_bounds = array<i64: 2>}, {transform_indices = @transform_1, window_bounds = array<i64: 8, 14>}, {pipeline_mode = #tpu.pipeline_mode<synchronous>, transform_indices = @transform_2, window_bounds = array<i64: 14, 512>}, {pipeline_mode = #tpu.pipeline_mode<synchronous>, transform_indices = @transform_3, window_bounds = array<i64: 1, 512>}, {pipeline_mode = #tpu.pipeline_mode<synchronous>, transform_indices = @transform_4, window_bounds = array<i64: 512, 512>}, {pipeline_mode = #tpu.pipeline_mode<synchronous>, transform_indices = @transform_5, window_bounds = array<i64: 1, 512>}, {pipeline_mode = #tpu.pipeline_mode<synchronous>, transform_indices = @transform_6, window_bounds = array<i64: 512, 128>}, {pipeline_mode = #tpu.pipeline_mode<synchronous>, transform_indices = @transform_7, window_bounds = array<i64: 1, 128>}, {transform_indices = @transform_8, window_bounds = array<i64: 8, 128>}]} {
    %c0 = arith.constant 0 : index
    %0 = memref.load %arg1[%c0] : memref<2xf32, #tpu.memory_space<smem>>
    %c1 = arith.constant 1 : index
    %1 = memref.load %arg1[%c1] : memref<2xf32, #tpu.memory_space<smem>>
    %c0_0 = arith.constant 0 : index
    %c0_1 = arith.constant 0 : index
    %2 = vector.load %arg2[%c0_0, %c0_1] : memref<8x14xf32, #tpu.memory_space<vmem>>, vector<8x14xf32>
    %3 = arith.truncf %2 : vector<8x14xf32> to vector<8x14xbf16>
    %c0_2 = arith.constant 0 : index
    %c0_3 = arith.constant 0 : index
    %4 = vector.load %arg3[%c0_2, %c0_3] : memref<14x512xbf16, #tpu.memory_space<vmem>>, vector<14x512xbf16>
    %cst = arith.constant dense<0.000000e+00> : vector<8x512xf32>
    %5 = tpu.matmul %3, %4, %cst {dimension_numbers = #tpu.dot_dimension_numbers<[1], [0], [0], [1], [0, 0, 1, 1], [], []>} : vector<8x14xbf16>, vector<14x512xbf16>, vector<8x512xf32> -> vector<8x512xf32>
    %c0_4 = arith.constant 0 : index
    %c0_5 = arith.constant 0 : index
    %6 = vector.load %arg4[%c0_4, %c0_5] : memref<1x512xf32, #tpu.memory_space<vmem>>, vector<1x512xf32>
    %7 = vector.broadcast %6 : vector<1x512xf32> to vector<8x512xf32>
    %8 = arith.addf %5, %7 : vector<8x512xf32>
    %cst_6 = arith.constant 0.000000e+00 : f32
    %9 = vector.broadcast %cst_6 : f32 to vector<8x512xf32>
    %10 = arith.maximumf %8, %9 : vector<8x512xf32>
    %11 = arith.truncf %10 : vector<8x512xf32> to vector<8x512xbf16>
    %c0_7 = arith.constant 0 : index
    %c0_8 = arith.constant 0 : index
    %12 = vector.load %arg5[%c0_7, %c0_8] : memref<512x512xbf16, #tpu.memory_space<vmem>>, vector<512x512xbf16>
    %cst_9 = arith.constant dense<0.000000e+00> : vector<8x512xf32>
    %13 = tpu.matmul %11, %12, %cst_9 {dimension_numbers = #tpu.dot_dimension_numbers<[1], [0], [0], [1], [0, 0, 1, 1], [], []>} : vector<8x512xbf16>, vector<512x512xbf16>, vector<8x512xf32> -> vector<8x512xf32>
    %c0_10 = arith.constant 0 : index
    %c0_11 = arith.constant 0 : index
    %14 = vector.load %arg6[%c0_10, %c0_11] : memref<1x512xf32, #tpu.memory_space<vmem>>, vector<1x512xf32>
    %15 = vector.broadcast %14 : vector<1x512xf32> to vector<8x512xf32>
    %16 = arith.addf %13, %15 : vector<8x512xf32>
    %cst_12 = arith.constant 0.000000e+00 : f32
    %17 = vector.broadcast %cst_12 : f32 to vector<8x512xf32>
    %18 = arith.maximumf %16, %17 : vector<8x512xf32>
    %19 = arith.truncf %18 : vector<8x512xf32> to vector<8x512xbf16>
    %c0_13 = arith.constant 0 : index
    %c0_14 = arith.constant 0 : index
    %20 = vector.load %arg7[%c0_13, %c0_14] : memref<512x128xbf16, #tpu.memory_space<vmem>>, vector<512x128xbf16>
    %cst_15 = arith.constant dense<0.000000e+00> : vector<8x128xf32>
    %21 = tpu.matmul %19, %20, %cst_15 {dimension_numbers = #tpu.dot_dimension_numbers<[1], [0], [0], [1], [0, 0, 1, 1], [], []>} : vector<8x512xbf16>, vector<512x128xbf16>, vector<8x128xf32> -> vector<8x128xf32>
    %c0_16 = arith.constant 0 : index
    %c0_17 = arith.constant 0 : index
    %22 = vector.load %arg8[%c0_16, %c0_17] : memref<1x128xf32, #tpu.memory_space<vmem>>, vector<1x128xf32>
    %23 = vector.broadcast %22 : vector<1x128xf32> to vector<8x128xf32>
    %24 = arith.addf %21, %23 : vector<8x128xf32>
    %25 = tpu.iota {dimensions = array<i32: 1>} : vector<8x128xi32>
    %c0_i32 = arith.constant 0 : i32
    %26 = vector.broadcast %c0_i32 : i32 to vector<8x128xi32>
    %27 = arith.cmpi eq, %25, %26 : vector<8x128xi32>
    %cst_18 = arith.constant 5.000000e-01 : f32
    %28 = vector.broadcast %cst_18 : f32 to vector<8x128xf32>
    %29 = arith.mulf %28, %24 : vector<8x128xf32>
    %30 = arith.select %27, %29, %24 : vector<8x128xi1>, vector<8x128xf32>
    %31 = math.tanh %30 : vector<8x128xf32>
    %c0_i32_19 = arith.constant 0 : i32
    %32 = vector.broadcast %c0_i32_19 : i32 to vector<8x128xi32>
    %33 = arith.cmpi eq, %25, %32 : vector<8x128xi32>
    %cst_20 = arith.constant 5.000000e-01 : f32
    %34 = vector.broadcast %cst_20 : f32 to vector<8x128xf32>
    %35 = arith.mulf %34, %31 : vector<8x128xf32>
    %cst_21 = arith.constant 5.000000e-01 : f32
    %36 = vector.broadcast %cst_21 : f32 to vector<8x128xf32>
    %37 = arith.addf %35, %36 : vector<8x128xf32>
    %38 = vector.broadcast %0 : f32 to vector<8x128xf32>
    %39 = arith.mulf %37, %38 : vector<8x128xf32>
    %c1_i32 = arith.constant 1 : i32
    %40 = vector.broadcast %c1_i32 : i32 to vector<8x128xi32>
    %41 = arith.cmpi eq, %25, %40 : vector<8x128xi32>
    %42 = vector.broadcast %1 : f32 to vector<8x128xf32>
    %43 = arith.mulf %31, %42 : vector<8x128xf32>
    %44 = arith.select %41, %43, %24 : vector<8x128xi1>, vector<8x128xf32>
    %45 = arith.select %33, %39, %44 : vector<8x128xi1>, vector<8x128xf32>
    %46 = arith.truncf %45 : vector<8x128xf32> to vector<8x128xbf16>
    %c0_22 = arith.constant 0 : index
    %c0_23 = arith.constant 0 : index
    %47 = vector.load %arg9[%c0_22, %c0_23] : memref<8x128xbf16, #tpu.memory_space<vmem>>, vector<8x128xbf16>
    tpu.vector_store %arg9[%c0_22, %c0_23], %46 {strides = array<i32>} : memref<8x128xbf16, #tpu.memory_space<vmem>>, vector<8x128xbf16>,
    return
  }
  func.func @transform_0(%arg0: i32) -> i32 {
    %c0_i32 = arith.constant 0 : i32
    %c0_i32_0 = arith.constant 0 : i32
    return %c0_i32 : i32
  }
  func.func @transform_1(%arg0: i32) -> (i32, i32) {
    %c0_i32 = arith.constant 0 : i32
    %c0_i32_0 = arith.constant 0 : i32
    return %arg0, %c0_i32 : i32, i32
  }
  func.func @transform_2(%arg0: i32) -> (i32, i32) {
    %c0_i32 = arith.constant 0 : i32
    %c0_i32_0 = arith.constant 0 : i32
    %c0_i32_1 = arith.constant 0 : i32
    return %c0_i32, %c0_i32_0 : i32, i32
  }
  func.func @transform_3(%arg0: i32) -> (i32, i32) {
    %c0_i32 = arith.constant 0 : i32
    %c0_i32_0 = arith.constant 0 : i32
    %c0_i32_1 = arith.constant 0 : i32
    return %c0_i32, %c0_i32_0 : i32, i32
  }
  func.func @transform_4(%arg0: i32) -> (i32, i32) {
    %c0_i32 = arith.constant 0 : i32
    %c0_i32_0 = arith.constant 0 : i32
    %c0_i32_1 = arith.constant 0 : i32
    return %c0_i32, %c0_i32_0 : i32, i32
  }
  func.func @transform_5(%arg0: i32) -> (i32, i32) {
    %c0_i32 = arith.constant 0 : i32
    %c0_i32_0 = arith.constant 0 : i32
    %c0_i32_1 = arith.constant 0 : i32
    return %c0_i32, %c0_i32_0 : i32, i32
  }
  func.func @transform_6(%arg0: i32) -> (i32, i32) {
    %c0_i32 = arith.constant 0 : i32
    %c0_i32_0 = arith.constant 0 : i32
    %c0_i32_1 = arith.constant 0 : i32
    return %c0_i32, %c0_i32_0 : i32, i32
  }
  func.func @transform_7(%arg0: i32) -> (i32, i32) {
    %c0_i32 = arith.constant 0 : i32
    %c0_i32_0 = arith.constant 0 : i32
    %c0_i32_1 = arith.constant 0 : i32
    return %c0_i32, %c0_i32_0 : i32, i32
  }
  func.func @transform_8(%arg0: i32) -> (i32, i32) {
    %c0_i32 = arith.constant 0 : i32
    %c0_i32_0 = arith.constant 0 : i32
    return %arg0, %c0_i32 : i32, i32
  }
}

</mosaic_0001>

<llo_original>
// kernel: tpu_custom_call.1
$region0: #{tpu_custom_call.1}
  #allocation0 [shape = 'u32[]', space=smem, size = 0x4, offset = 0x4, fixed_abs, tag = 'smem constant byte address 0x4 - core index']
  #allocation1 [shape = 'u32[144,128]{1,0:T(1,128)}', space=vmem, size = 0x12000, scoped, tag = 'internal scratch']
  %s0 = inlined_call_operand.hbm [shape: f32[2], index: 0, kind: input, shape index: {}]
  %s1 = inlined_call_operand.hbm [shape: f32[8,14], index: 1, kind: input, shape index: {}]
  %s2 = inlined_call_operand.hbm [shape: bf16[14,512], index: 2, kind: input, shape index: {}]
  %s3 = inlined_call_operand.vmem [shape: f32[1,512], index: 3, kind: input, shape index: {}]
  %s4 = inlined_call_operand.hbm [shape: bf16[512,512], index: 4, kind: input, shape index: {}]
  %s5 = inlined_call_operand.vmem [shape: f32[1,512], index: 5, kind: input, shape index: {}]
  %s6 = inlined_call_operand.hbm [shape: bf16[512,128], index: 6, kind: input, shape index: {}]
  %s7 = inlined_call_operand.vmem [shape: f32[1,128], index: 7, kind: input, shape index: {}]
  %s8 = inlined_call_operand.hbm [shape: bf16[8,128], index: 8, kind: output, shape index: {}]
  %s9 = sld [smem:[#allocation0]]
  $region62: #{tpu_custom_call.1} parent=0
    _
  %s11 = ssub.s32 1, %s9
  %s12 = scalar_select 0, %s11, %s9
  $region1: #{tpu_custom_call.1} parent=0
    #allocation2 [shape = 'u8[512]{0}', space=smem, size = 0x200, scoped, tag = 'input window, operand 0, single buffered']
    #allocation3 [shape = 's32[1]{0}', space=sflag, size = 0x4, scoped, tag = 'scoped memory for tpu_custom_call.1']
    #allocation4 [shape = 's32[1]{0}', space=sflag, size = 0x4, scoped, tag = 'scoped memory for tpu_custom_call.1']
    #allocation5 [shape = 's32[1]{0}', space=sflag, size = 0x4, scoped, tag = 'scoped memory for tpu_custom_call.1']
    #allocation6 [shape = 'u8[4096]{0}', space=vmem, size = 0x1000, scoped, tag = 'input window, operand 1, single buffered']
    #allocation7 [shape = 'u8[16384]{0}', space=vmem, size = 0x4000, scoped, tag = 'input window, operand 2, single buffered']
    #allocation8 [shape = 's32[1]{0}', space=sflag, size = 0x4, scoped, tag = 'scoped memory for tpu_custom_call.1']
    #allocation9 [shape = 'u8[524288]{0}', space=vmem, size = 0x80000, scoped, tag = 'input window, operand 4, single buffered']
    #allocation10 [shape = 'u8[131072]{0}', space=vmem, size = 0x20000, scoped, tag = 'input window, operand 6, single buffered']
    #allocation11 [shape = 's32[1]{0}', space=sflag, size = 0x4, scoped, tag = 'scoped memory for tpu_custom_call.1']
    #allocation12 [shape = 'u8[2048]{0}', space=vmem, size = 0x800, scoped, tag = 'output window, operand 0, single buffered']
    %13 = vsyncpa [#allocation5], 0
    %14 = vsyncpa [#allocation3], 0
    %15 = vsyncpa [#allocation8], 0
    %16 = vsyncpa [#allocation11], 0
    %17 = vsyncpa [#allocation4], 0
    // Predicated region
    $region2: #{tpu_custom_call.1} parent=1 // pred_check
      _
    $region3: #{tpu_custom_call.1} parent=1 // pred_check_branch
      %19 = sbr.rel (0) target = $region5
    $region4: #{tpu_custom_call.1} parent=1 // pred_region
      %s21 = ssub.s32 16, 16
      %22 = vsyncadd [#allocation5], %s21
      %25 = dma.hbm_to_smem %s0, 16, [#allocation2], [#allocation5]
    $region5: #{tpu_custom_call.1} parent=1 // pred_fallthru
      _
    // Predicated region
    $region6: #{tpu_custom_call.1} parent=1 // pred_check
      _
    $region7: #{tpu_custom_call.1} parent=1 // pred_check_branch
      %27 = sbr.rel (0) target = $region9
    $region8: #{tpu_custom_call.1} parent=1 // pred_region
      %s29 = ssub.s32 128, 128
      %30 = vsyncadd [#allocation3], %s29
      %s32 = sshll.u32 [#allocation6], 4
      %s33 = int_to_ptr.vmem [resolvable:$true] %s32
      %35 = dma.hbm_to_vmem [thread:$0]  %s1, 128, %s33, [#allocation3]
    $region9: #{tpu_custom_call.1} parent=1 // pred_fallthru
      _
    // Predicated region
    $region10: #{tpu_custom_call.1} parent=1 // pred_check
      _
    $region11: #{tpu_custom_call.1} parent=1 // pred_check_branch
      %37 = sbr.rel (0) target = $region13
    $region12: #{tpu_custom_call.1} parent=1 // pred_region
      %s39 = ssub.s32 512, 512
      %40 = vsyncadd [#allocation8], %s39
      %s41 = sshll.u32 [#allocation7], 4
      %s42 = int_to_ptr.vmem [resolvable:$true] %s41
      %47 = dma.hbm_to_vmem [thread:$0]  %s2, 512, %s42, [#allocation8], 256, 256, 16
    $region13: #{tpu_custom_call.1} parent=1 // pred_fallthru
      _
    // Predicated region
    $region14: #{tpu_custom_call.1} parent=1 // pred_check
      _
    $region15: #{tpu_custom_call.1} parent=1 // pred_check_branch
      %49 = sbr.rel (0) target = $region17
    $region16: #{tpu_custom_call.1} parent=1 // pred_region
      _
    $region17: #{tpu_custom_call.1} parent=1 // pred_fallthru
      _
    // Predicated region
    $region18: #{tpu_custom_call.1} parent=1 // pred_check
      _
    $region19: #{tpu_custom_call.1} parent=1 // pred_check_branch
      %51 = sbr.rel (0) target = $region21
    $region20: #{tpu_custom_call.1} parent=1 // pred_region
      %s53 = ssub.s32 16384, 16384
      %54 = vsyncadd [#allocation8], %s53
      %s55 = sshll.u32 [#allocation9], 4
      %s56 = int_to_ptr.vmem [resolvable:$true] %s55
      %61 = dma.hbm_to_vmem [thread:$0]  %s4, 16384, %s56, [#allocation8], 256, 256, 16
    $region21: #{tpu_custom_call.1} parent=1 // pred_fallthru
      _
    // Predicated region
    $region22: #{tpu_custom_call.1} parent=1 // pred_check
      _
    $region23: #{tpu_custom_call.1} parent=1 // pred_check_branch
      %63 = sbr.rel (0) target = $region25
    $region24: #{tpu_custom_call.1} parent=1 // pred_region
      _
    $region25: #{tpu_custom_call.1} parent=1 // pred_fallthru
      _
    // Predicated region
    $region26: #{tpu_custom_call.1} parent=1 // pred_check
      _
    $region27: #{tpu_custom_call.1} parent=1 // pred_check_branch
      %65 = sbr.rel (0) target = $region29
    $region28: #{tpu_custom_call.1} parent=1 // pred_region
      %s67 = ssub.s32 4096, 4096
      %68 = vsyncadd [#allocation11], %s67
      %s69 = sshll.u32 [#allocation10], 4
      %s70 = int_to_ptr.vmem [resolvable:$true] %s69
      %75 = dma.hbm_to_vmem [thread:$0]  %s6, 4096, %s70, [#allocation11], 64, 64, 4
    $region29: #{tpu_custom_call.1} parent=1 // pred_fallthru
      _
    // Predicated region
    $region30: #{tpu_custom_call.1} parent=1 // pred_check
      _
    $region31: #{tpu_custom_call.1} parent=1 // pred_check_branch
      %77 = sbr.rel (0) target = $region33
    $region32: #{tpu_custom_call.1} parent=1 // pred_region
      _
    $region33: #{tpu_custom_call.1} parent=1 // pred_fallthru
      _
    // Predicated region
    $region34: #{tpu_custom_call.1} parent=1 // pred_check
      _
    $region35: #{tpu_custom_call.1} parent=1 // pred_check_branch
      %79 = sbr.rel (0) target = $region37
    $region36: #{tpu_custom_call.1} parent=1 // pred_region
      %80 = dma.done [#allocation5], 16
    $region37: #{tpu_custom_call.1} parent=1 // pred_fallthru
      _
    // Predicated region
    $region38: #{tpu_custom_call.1} parent=1 // pred_check
      _
    $region39: #{tpu_custom_call.1} parent=1 // pred_check_branch
      %82 = sbr.rel (0) target = $region41
    $region40: #{tpu_custom_call.1} parent=1 // pred_region
      %83 = dma.done [#allocation3], 128
    $region41: #{tpu_custom_call.1} parent=1 // pred_fallthru
      _
    // Predicated region
    $region42: #{tpu_custom_call.1} parent=1 // pred_check
      _
    $region43: #{tpu_custom_call.1} parent=1 // pred_check_branch
      %85 = sbr.rel (0) target = $region45
    $region44: #{tpu_custom_call.1} parent=1 // pred_region
      %86 = dma.done [#allocation8], 512
    $region45: #{tpu_custom_call.1} parent=1 // pred_fallthru
      _
    // Predicated region
    $region46: #{tpu_custom_call.1} parent=1 // pred_check
      _
    $region47: #{tpu_custom_call.1} parent=1 // pred_check_branch
      %88 = sbr.rel (0) target = $region49
    $region48: #{tpu_custom_call.1} parent=1 // pred_region
      %89 = dma.done [#allocation8], 16384
    $region49: #{tpu_custom_call.1} parent=1 // pred_fallthru
      _
    // Predicated region
    $region50: #{tpu_custom_call.1} parent=1 // pred_check
      _
    $region51: #{tpu_custom_call.1} parent=1 // pred_check_branch
      %91 = sbr.rel (0) target = $region53
    $region52: #{tpu_custom_call.1} parent=1 // pred_region
      %92 = dma.done [#allocation11], 4096
    $region53: #{tpu_custom_call.1} parent=1 // pred_fallthru
      _
    %93 = sfence
    %s95 = sld [smem:[#allocation2]]
    %s96 = sld [smem:[#allocation2 + $0x1]]
    %v97 = vld [vmem:[#allocation6] sm:$0xff]
    %v98 = vpack.c.bf16 %v97, %v97
    %v99 = vld [vmem:[#allocation7] sm:$0xff]
    %v100 = vld [vmem:[#allocation7 + $0x8] sm:$0xff]
    %v101 = vld [vmem:[#allocation7 + $0x10] sm:$0x77]
    %v102 = vld [vmem:[#allocation7 + $0x18] sm:$0x77]
    %v103 = vld [vmem:[%s3] sm:$0xf]
    %v105 = vlaneseq
    %v106 = vshrl.u32 %v105, 7
    %v107 = vsub.s32 0, %v106
    %v108 = vrot.slane %v103, %v107
    %v109 = vlaneseq
    %v110 = vshrl.u32 %v109, 7
    %v111 = vsub.s32 1, %v110
    %v112 = vrot.slane %v103, %v111
    %v113 = vlaneseq
    %v114 = vshrl.u32 %v113, 7
    %v115 = vsub.s32 2, %v114
    %v116 = vrot.slane %v103, %v115
    %v117 = vlaneseq
    %v118 = vshrl.u32 %v117, 7
    %v119 = vsub.s32 3, %v118
    %v120 = vrot.slane %v103, %v119
    %v129 = vunpack.c.l.b16 %v99
    %v130 = vunpack.c.h.b16 %v99
    %v131 = vunpack.c.l.b16 %v100
    %v132 = vunpack.c.h.b16 %v100
    %v133 = vunpack.c.l.b16 %v101
    %v134 = vunpack.c.h.b16 %v101
    %v135 = vunpack.c.l.b16 %v102
    %v136 = vunpack.c.h.b16 %v102
    %v137 = vpack.c.b16 %v133, %v129
    %v138 = vpack.c.b16 %v134, %v130
    %v139 = vpack.c.b16 %v135, %v131
    %v140 = vpack.c.b16 %v136, %v132
    %vm141 = vcmask 113664
    %v143 = vsel %vm141, %v98, 0
    %vm145 = vcmask 1046528
    %v147 = vsel %vm145, %v137, 0
    %v150 = vsel %vm145, %v138, 0
    %v153 = vsel %vm145, %v139, 0
    %v156 = vsel %vm145, %v140, 0
    %158 = vmatprep.subr.bf16.mxu0 %v150
    %159 = vmatpush1.bf16.msra.mxu0 %v147
    %160 = vmatprep.subr.bf16.mxu0 0
    %161 = vmatpush1.bf16.msra.mxu0 0
    %162 = vmatprep.subr.bf16.mxu0 0
    %163 = vmatpush1.bf16.msra.mxu0 0
    %164 = vmatprep.subr.bf16.mxu0 0
    %165 = vmatpush1.bf16.msra.mxu0 0
    %166 = vmatprep.subr.bf16.mxu0 0
    %167 = vmatpush1.bf16.msra.mxu0 0
    %168 = vmatprep.subr.bf16.mxu0 0
    %169 = vmatpush1.bf16.msra.mxu0 0
    %170 = vmatprep.subr.bf16.mxu0 0
    %171 = vmatpush1.bf16.msra.mxu0 0
    %172 = vmatprep.subr.bf16.mxu0 0
    %173 = vmatpush1.bf16.msra.mxu0 0
    %174 = vmatprep.subr.bf16.mxu0 0
    %175 = vmatpush1.bf16.msra.mxu0 0
    %176 = vmatprep.subr.bf16.mxu0 0
    %177 = vmatpush1.bf16.msra.mxu0 0
    %178 = vmatprep.subr.bf16.mxu0 0
    %179 = vmatpush1.bf16.msra.mxu0 0
    %180 = vmatprep.subr.bf16.mxu0 0
    %181 = vmatpush1.bf16.msra.mxu0 0
    %182 = vmatprep.subr.bf16.mxu0 0
    %183 = vmatpush1.bf16.msra.mxu0 0
    %184 = vmatprep.subr.bf16.mxu0 0
    %185 = vmatpush1.bf16.msra.mxu0 0
    %186 = vmatprep.subr.bf16.mxu0 0
    %187 = vmatpush1.bf16.msra.mxu0 0
    %188 = vmatprep.subr.bf16.mxu0 0
    %189 = vmatpush1.bf16.msra.mxu0 0
    %190 = vmatprep.mubr.bf16.mxu0 0
    %191 = vmatmul.mubr.bf16.gmra.mrb[0].mxu0 %v143
    %v192 = vpop.f32.mrb[0].mxu0
    %v193 = vadd.f32 %v108, %v192
    %v194 = vpop.f32.mrb[0].mxu0
    %v195 = vadd.f32 %v112, %v194
    %v196 = vpop.f32.mrb[0].mxu0
    %v197 = vpop.f32.mrb[0].mxu0
    %198 = vdwg.mxu0
    %199 = vmatprep.subr.bf16.mxu0 %v156
    %200 = vmatpush1.bf16.msra.mxu0 %v153
    %201 = vmatprep.subr.bf16.mxu0 0
    %202 = vmatpush1.bf16.msra.mxu0 0
    %203 = vmatprep.subr.bf16.mxu0 0
    %204 = vmatpush1.bf16.msra.mxu0 0
    %205 = vmatprep.subr.bf16.mxu0 0
    %206 = vmatpush1.bf16.msra.mxu0 0
    %207 = vmatprep.subr.bf16.mxu0 0
    %208 = vmatpush1.bf16.msra.mxu0 0
    %209 = vmatprep.subr.bf16.mxu0 0
    %210 = vmatpush1.bf16.msra.mxu0 0
    %211 = vmatprep.subr.bf16.mxu0 0
    %212 = vmatpush1.bf16.msra.mxu0 0
    %213 = vmatprep.subr.bf16.mxu0 0
    %214 = vmatpush1.bf16.msra.mxu0 0
    %215 = vmatprep.subr.bf16.mxu0 0
    %216 = vmatpush1.bf16.msra.mxu0 0
    %217 = vmatprep.subr.bf16.mxu0 0
    %218 = vmatpush1.bf16.msra.mxu0 0
    %219 = vmatprep.subr.bf16.mxu0 0
    %220 = vmatpush1.bf16.msra.mxu0 0
    %221 = vmatprep.subr.bf16.mxu0 0
    %222 = vmatpush1.bf16.msra.mxu0 0
    %223 = vmatprep.subr.bf16.mxu0 0
    %224 = vmatpush1.bf16.msra.mxu0 0
    %225 = vmatprep.subr.bf16.mxu0 0
    %226 = vmatpush1.bf16.msra.mxu0 0
    %227 = vmatprep.subr.bf16.mxu0 0
    %228 = vmatpush1.bf16.msra.mxu0 0
    %229 = vmatprep.subr.bf16.mxu0 0
    %230 = vmatpush1.bf16.msra.mxu0 0
    %231 = vmatprep.mubr.bf16.mxu0 0
    %232 = vmatmul.mubr.bf16.gmra.mrb[0].mxu0 %v143
    %v233 = vpop.f32.mrb[0].mxu0
    %v234 = vadd.f32 %v116, %v233
    %v235 = vpop.f32.mrb[0].mxu0
    %v236 = vadd.f32 %v120, %v235
    %v237 = vpop.f32.mrb[0].mxu0
    %v238 = vpop.f32.mrb[0].mxu0
    %239 = vdwg.mxu0
    %v240 = vmax.f32 %v193, 0.0
    %v241 = vmax.f32 %v195, 0.0
    %v242 = vmax.f32 %v234, 0.0
    %v243 = vmax.f32 %v236, 0.0
    %v244 = vpack.c.bf16 %v240, %v240
    %v245 = vpack.c.bf16 %v241, %v241
    %v246 = vpack.c.bf16 %v242, %v242
    %v247 = vpack.c.bf16 %v243, %v243
    %v248 = vld [vmem:[#allocation9] sm:$0xff]
    %v249 = vld [vmem:[#allocation9 + $0x8] sm:$0xff]
    %v250 = vld [vmem:[#allocation9 + $0x10] sm:$0xff]
    %v251 = vld [vmem:[#allocation9 + $0x18] sm:$0xff]
    %v252 = vld [vmem:[#allocation9 + $0x20] sm:$0xff]
    %v253 = vld [vmem:[#allocation9 + $0x28] sm:$0xff]
    %v254 = vld [vmem:[#allocation9 + $0x30] sm:$0xff]
    %v255 = vld [vmem:[#allocation9 + $0x38] sm:$0xff]
    %v256 = vld [vmem:[#allocation9 + $0x40] sm:$0xff]
    %v257 = vld [vmem:[#allocation9 + $0x48] sm:$0xff]
    %v258 = vld [vmem:[#allocation9 + $0x50] sm:$0xff]
    %v259 = vld [vmem:[#allocation9 + $0x58] sm:$0xff]
    %v260 = vld [vmem:[#allocation9 + $0x60] sm:$0xff]
    %v261 = vld [vmem:[#allocation9 + $0x68] sm:$0xff]
    %v262 = vld [vmem:[#allocation9 + $0x70] sm:$0xff]
    %v263 = vld [vmem:[#allocation9 + $0x78] sm:$0xff]
    %v264 = vld [vmem:[#allocation9 + $0x80] sm:$0xff]
    %v265 = vld [vmem:[#allocation9 + $0x88] sm:$0xff]
    %v266 = vld [vmem:[#allocation9 + $0x90] sm:$0xff]
    %v267 = vld [vmem:[#allocation9 + $0x98] sm:$0xff]
    %v268 = vld [vmem:[#allocation9 + $0xa0] sm:$0xff]
    %v269 = vld [vmem:[#allocation9 + $0xa8] sm:$0xff]
    %v270 = vld [vmem:[#allocation9 + $0xb0] sm:$0xff]
    %v271 = vld [vmem:[#allocation9 + $0xb8] sm:$0xff]
    %v272 = vld [vmem:[#allocation9 + $0xc0] sm:$0xff]
    %v273 = vld [vmem:[#allocation9 + $0xc8] sm:$0xff]
    %v274 = vld [vmem:[#allocation9 + $0xd0] sm:$0xff]
    %v275 = vld [vmem:[#allocation9 + $0xd8] sm:$0xff]
    %v276 = vld [vmem:[#allocation9 + $0xe0] sm:$0xff]
    %v277 = vld [vmem:[#allocation9 + $0xe8] sm:$0xff]
    %v278 = vld [vmem:[#allocation9 + $0xf0] sm:$0xff]
    %v279 = vld [vmem:[#allocation9 + $0xf8] sm:$0xff]
    %v280 = vld [vmem:[#allocation9 + $0x100] sm:$0xff]
    %v281 = vld [vmem:[#allocation9 + $0x108] sm:$0xff]
    %v282 = vld [vmem:[#allocation9 + $0x110] sm:$0xff]
    %v283 = vld [vmem:[#allocation9 + $0x118] sm:$0xff]
    %v284 = vld [vmem:[#allocation9 + $0x120] sm:$0xff]
    %v285 = vld [vmem:[#allocation9 + $0x128] sm:$0xff]
    %v286 = vld [vmem:[#allocation9 + $0x130] sm:$0xff]
    %v287 = vld [vmem:[#allocation9 + $0x138] sm:$0xff]
    %v288 = vld [vmem:[#allocation9 + $0x140] sm:$0xff]
    %v289 = vld [vmem:[#allocation9 + $0x148] sm:$0xff]
    %v290 = vld [vmem:[#allocation9 + $0x150] sm:$0xff]
    %v291 = vld [vmem:[#allocation9 + $0x158] sm:$0xff]
    %v292 = vld [vmem:[#allocation9 + $0x160] sm:$0xff]
    %v293 = vld [vmem:[#allocation9 + $0x168] sm:$0xff]
    %v294 = vld [vmem:[#allocation9 + $0x170] sm:$0xff]
    %v295 = vld [vmem:[#allocation9 + $0x178] sm:$0xff]
    %v296 = vld [vmem:[#allocation9 + $0x180] sm:$0xff]
    %v297 = vld [vmem:[#allocation9 + $0x188] sm:$0xff]
    %v298 = vld [vmem:[#allocation9 + $0x190] sm:$0xff]
    %v299 = vld [vmem:[#allocation9 + $0x198] sm:$0xff]
    %v300 = vld [vmem:[#allocation9 + $0x1a0] sm:$0xff]
    %v301 = vld [vmem:[#allocation9 + $0x1a8] sm:$0xff]
    %v302 = vld [vmem:[#allocation9 + $0x1b0] sm:$0xff]
    %v303 = vld [vmem:[#allocation9 + $0x1b8] sm:$0xff]
    %v304 = vld [vmem:[#allocation9 + $0x1c0] sm:$0xff]
    %v305 = vld [vmem:[#allocation9 + $0x1c8] sm:$0xff]
    %v306 = vld [vmem:[#allocation9 + $0x1d0] sm:$0xff]
    %v307 = vld [vmem:[#allocation9 + $0x1d8] sm:$0xff]
    %v308 = vld [vmem:[#allocation9 + $0x1e0] sm:$0xff]
    %v309 = vld [vmem:[#allocation9 + $0x1e8] sm:$0xff]
    %v310 = vld [vmem:[#allocation9 + $0x1f0] sm:$0xff]
    %v311 = vld [vmem:[#allocation9 + $0x1f8] sm:$0xff]
    %v312 = vld [vmem:[#allocation9 + $0x200] sm:$0xff]
    %v313 = vld [vmem:[#allocation9 + $0x208] sm:$0xff]
    %v314 = vld [vmem:[#allocation9 + $0x210] sm:$0xff]
    %v315 = vld [vmem:[#allocation9 + $0x218] sm:$0xff]
    %v316 = vld [vmem:[#allocation9 + $0x220] sm:$0xff]
    %v317 = vld [vmem:[#allocation9 + $0x228] sm:$0xff]
    %v318 = vld [vmem:[#allocation9 + $0x230] sm:$0xff]
    %v319 = vld [vmem:[#allocation9 + $0x238] sm:$0xff]
    %v320 = vld [vmem:[#allocation9 + $0x240] sm:$0xff]
    %v321 = vld [vmem:[#allocation9 + $0x248] sm:$0xff]
    %v322 = vld [vmem:[#allocation9 + $0x250] sm:$0xff]
    %v323 = vld [vmem:[#allocation9 + $0x258] sm:$0xff]
    %v324 = vld [vmem:[#allocation9 + $0x260] sm:$0xff]
    %v325 = vld [vmem:[#allocation9 + $0x268] sm:$0xff]
    %v326 = vld [vmem:[#allocation9 + $0x270] sm:$0xff]
    %v327 = vld [vmem:[#allocation9 + $0x278] sm:$0xff]
    %v328 = vld [vmem:[#allocation9 + $0x280] sm:$0xff]
    %v329 = vld [vmem:[#allocation9 + $0x288] sm:$0xff]
    %v330 = vld [vmem:[#allocation9 + $0x290] sm:$0xff]
    %v331 = vld [vmem:[#allocation9 + $0x298] sm:$0xff]
    %v332 = vld [vmem:[#allocation9 + $0x2a0] sm:$0xff]
    %v333 = vld [vmem:[#allocation9 + $0x2a8] sm:$0xff]
    %v334 = vld [vmem:[#allocation9 + $0x2b0] sm:$0xff]
    %v335 = vld [vmem:[#allocation9 + $0x2b8] sm:$0xff]
    %v336 = vld [vmem:[#allocation9 + $0x2c0] sm:$0xff]
    %v337 = vld [vmem:[#allocation9 + $0x2c8] sm:$0xff]
    %v338 = vld [vmem:[#allocation9 + $0x2d0] sm:$0xff]
    %v339 = vld [vmem:[#allocation9 + $0x2d8] sm:$0xff]
    %v340 = vld [vmem:[#allocation9 + $0x2e0] sm:$0xff]
    %v341 = vld [vmem:[#allocation9 + $0x2e8] sm:$0xff]
    %v342 = vld [vmem:[#allocation9 + $0x2f0] sm:$0xff]
    %v343 = vld [vmem:[#allocation9 + $0x2f8] sm:$0xff]
    %v344 = vld [vmem:[#allocation9 + $0x300] sm:$0xff]
    %v345 = vld [vmem:[#allocation9 + $0x308] sm:$0xff]
    %v346 = vld [vmem:[#allocation9 + $0x310] sm:$0xff]
    %v347 = vld [vmem:[#allocation9 + $0x318] sm:$0xff]
    %v348 = vld [vmem:[#allocation9 + $0x320] sm:$0xff]
    %v349 = vld [vmem:[#allocation9 + $0x328] sm:$0xff]
    %v350 = vld [vmem:[#allocation9 + $0x330] sm:$0xff]
    %v351 = vld [vmem:[#allocation9 + $0x338] sm:$0xff]
    %v352 = vld [vmem:[#allocation9 + $0x340] sm:$0xff]
    %v353 = vld [vmem:[#allocation9 + $0x348] sm:$0xff]
    %v354 = vld [vmem:[#allocation9 + $0x350] sm:$0xff]
    %v355 = vld [vmem:[#allocation9 + $0x358] sm:$0xff]
    %v356 = vld [vmem:[#allocation9 + $0x360] sm:$0xff]
    %v357 = vld [vmem:[#allocation9 + $0x368] sm:$0xff]
    %v358 = vld [vmem:[#allocation9 + $0x370] sm:$0xff]
    %v359 = vld [vmem:[#allocation9 + $0x378] sm:$0xff]
    %v360 = vld [vmem:[#allocation9 + $0x380] sm:$0xff]
    %v361 = vld [vmem:[#allocation9 + $0x388] sm:$0xff]
    %v362 = vld [vmem:[#allocation9 + $0x390] sm:$0xff]
    %v363 = vld [vmem:[#allocation9 + $0x398] sm:$0xff]
    %v364 = vld [vmem:[#allocation9 + $0x3a0] sm:$0xff]
    %v365 = vld [vmem:[#allocation9 + $0x3a8] sm:$0xff]
    %v366 = vld [vmem:[#allocation9 + $0x3b0] sm:$0xff]
    %v367 = vld [vmem:[#allocation9 + $0x3b8] sm:$0xff]
    %v368 = vld [vmem:[#allocation9 + $0x3c0] sm:$0xff]
    %v369 = vld [vmem:[#allocation9 + $0x3c8] sm:$0xff]
    %v370 = vld [vmem:[#allocation9 + $0x3d0] sm:$0xff]
    %v371 = vld [vmem:[#allocation9 + $0x3d8] sm:$0xff]
    %v372 = vld [vmem:[#allocation9 + $0x3e0] sm:$0xff]
    %v373 = vld [vmem:[#allocation9 + $0x3e8] sm:$0xff]
    %v374 = vld [vmem:[#allocation9 + $0x3f0] sm:$0xff]
    %v375 = vld [vmem:[#allocation9 + $0x3f8] sm:$0xff]
    %v376 = vld [vmem:[%s5] sm:$0xf]
    %v378 = vlaneseq
    %v379 = vshrl.u32 %v378, 7
    %v380 = vsub.s32 0, %v379
    %v381 = vrot.slane %v376, %v380
    %v382 = vlaneseq
    %v383 = vshrl.u32 %v382, 7
    %v384 = vsub.s32 1, %v383
    %v385 = vrot.slane %v376, %v384
    %v386 = vlaneseq
    %v387 = vshrl.u32 %v386, 7
    %v388 = vsub.s32 2, %v387
    %v389 = vrot.slane %v376, %v388
    %v390 = vlaneseq
    %v391 = vshrl.u32 %v390, 7
    %v392 = vsub.s32 3, %v391
    %v393 = vrot.slane %v376, %v392
    %v526 = vunpack.c.l.b16 %v248
    %v527 = vunpack.c.h.b16 %v248
    %v528 = vunpack.c.l.b16 %v249
    %v529 = vunpack.c.h.b16 %v249
    %v530 = vunpack.c.l.b16 %v250
    %v531 = vunpack.c.h.b16 %v250
    %v532 = vunpack.c.l.b16 %v251
    %v533 = vunpack.c.h.b16 %v251
    %v534 = vunpack.c.l.b16 %v252
    %v535 = vunpack.c.h.b16 %v252
    %v536 = vunpack.c.l.b16 %v253
    %v537 = vunpack.c.h.b16 %v253
    %v538 = vunpack.c.l.b16 %v254
    %v539 = vunpack.c.h.b16 %v254
    %v540 = vunpack.c.l.b16 %v255
    %v541 = vunpack.c.h.b16 %v255
    %v542 = vunpack.c.l.b16 %v256
    %v543 = vunpack.c.h.b16 %v256
    %v544 = vunpack.c.l.b16 %v257
    %v545 = vunpack.c.h.b16 %v257
    %v546 = vunpack.c.l.b16 %v258
    %v547 = vunpack.c.h.b16 %v258
    %v548 = vunpack.c.l.b16 %v259
    %v549 = vunpack.c.h.b16 %v259
    %v550 = vunpack.c.l.b16 %v260
    %v551 = vunpack.c.h.b16 %v260
    %v552 = vunpack.c.l.b16 %v261
    %v553 = vunpack.c.h.b16 %v261
    %v554 = vunpack.c.l.b16 %v262
    %v555 = vunpack.c.h.b16 %v262
    %v556 = vunpack.c.l.b16 %v263
    %v557 = vunpack.c.h.b16 %v263
    %v558 = vunpack.c.l.b16 %v264
    %v559 = vunpack.c.h.b16 %v264
    %v560 = vunpack.c.l.b16 %v265
    %v561 = vunpack.c.h.b16 %v265
    %v562 = vunpack.c.l.b16 %v266
    %v563 = vunpack.c.h.b16 %v266
    %v564 = vunpack.c.l.b16 %v267
    %v565 = vunpack.c.h.b16 %v267
    %v566 = vunpack.c.l.b16 %v268
    %v567 = vunpack.c.h.b16 %v268
    %v568 = vunpack.c.l.b16 %v269
    %v569 = vunpack.c.h.b16 %v269
    %v570 = vunpack.c.l.b16 %v270
    %v571 = vunpack.c.h.b16 %v270
    %v572 = vunpack.c.l.b16 %v271
    %v573 = vunpack.c.h.b16 %v271
    %v574 = vunpack.c.l.b16 %v272
    %v575 = vunpack.c.h.b16 %v272
    %v576 = vunpack.c.l.b16 %v273
    %v577 = vunpack.c.h.b16 %v273
    %v578 = vunpack.c.l.b16 %v274
    %v579 = vunpack.c.h.b16 %v274
    %v580 = vunpack.c.l.b16 %v275
    %v581 = vunpack.c.h.b16 %v275
    %v582 = vunpack.c.l.b16 %v276
    %v583 = vunpack.c.h.b16 %v276
    %v584 = vunpack.c.l.b16 %v277
    %v585 = vunpack.c.h.b16 %v277
    %v586 = vunpack.c.l.b16 %v278
    %v587 = vunpack.c.h.b16 %v278
    %v588 = vunpack.c.l.b16 %v279
    %v589 = vunpack.c.h.b16 %v279
    %v590 = vunpack.c.l.b16 %v280
    %v591 = vunpack.c.h.b16 %v280
    %v592 = vunpack.c.l.b16 %v281
    %v593 = vunpack.c.h.b16 %v281
    %v594 = vunpack.c.l.b16 %v282
    %v595 = vunpack.c.h.b16 %v282
    %v596 = vunpack.c.l.b16 %v283
    %v597 = vunpack.c.h.b16 %v283
    %v598 = vunpack.c.l.b16 %v284
    %v599 = vunpack.c.h.b16 %v284
    %v600 = vunpack.c.l.b16 %v285
    %v601 = vunpack.c.h.b16 %v285
    %v602 = vunpack.c.l.b16 %v286
    %v603 = vunpack.c.h.b16 %v286
    %v604 = vunpack.c.l.b16 %v287
    %v605 = vunpack.c.h.b16 %v287
    %v606 = vunpack.c.l.b16 %v288
    %v607 = vunpack.c.h.b16 %v288
    %v608 = vunpack.c.l.b16 %v289
    %v609 = vunpack.c.h.b16 %v289
    %v610 = vunpack.c.l.b16 %v290
    %v611 = vunpack.c.h.b16 %v290
    %v612 = vunpack.c.l.b16 %v291
    %v613 = vunpack.c.h.b16 %v291
    %v614 = vunpack.c.l.b16 %v292
    %v615 = vunpack.c.h.b16 %v292
    %v616 = vunpack.c.l.b16 %v293
    %v617 = vunpack.c.h.b16 %v293
    %v618 = vunpack.c.l.b16 %v294
    %v619 = vunpack.c.h.b16 %v294
    %v620 = vunpack.c.l.b16 %v295
    %v621 = vunpack.c.h.b16 %v295
    %v622 = vunpack.c.l.b16 %v296
    %v623 = vunpack.c.h.b16 %v296
    %v624 = vunpack.c.l.b16 %v297
    %v625 = vunpack.c.h.b16 %v297
    %v626 = vunpack.c.l.b16 %v298
    %v627 = vunpack.c.h.b16 %v298
    %v628 = vunpack.c.l.b16 %v299
    %v629 = vunpack.c.h.b16 %v299
    %v630 = vunpack.c.l.b16 %v300
    %v631 = vunpack.c.h.b16 %v300
    %v632 = vunpack.c.l.b16 %v301
    %v633 = vunpack.c.h.b16 %v301
    %v634 = vunpack.c.l.b16 %v302
    %v635 = vunpack.c.h.b16 %v302
    %v636 = vunpack.c.l.b16 %v303
    %v637 = vunpack.c.h.b16 %v303
    %v638 = vunpack.c.l.b16 %v304
    %v639 = vunpack.c.h.b16 %v304
    %v640 = vunpack.c.l.b16 %v305
    %v641 = vunpack.c.h.b16 %v305
    %v642 = vunpack.c.l.b16 %v306
    %v643 = vunpack.c.h.b16 %v306
    %v644 = vunpack.c.l.b16 %v307
    %v645 = vunpack.c.h.b16 %v307
    %v646 = vunpack.c.l.b16 %v308
    %v647 = vunpack.c.h.b16 %v308
    %v648 = vunpack.c.l.b16 %v309
    %v649 = vunpack.c.h.b16 %v309
    %v650 = vunpack.c.l.b16 %v310
    %v651 = vunpack.c.h.b16 %v310
    %v652 = vunpack.c.l.b16 %v311
    %v653 = vunpack.c.h.b16 %v311
    %v654 = vunpack.c.l.b16 %v312
    %v655 = vunpack.c.h.b16 %v312
    %v656 = vunpack.c.l.b16 %v313
    %v657 = vunpack.c.h.b16 %v313
    %v658 = vunpack.c.l.b16 %v314
    %v659 = vunpack.c.h.b16 %v314
    %v660 = vunpack.c.l.b16 %v315
    %v661 = vunpack.c.h.b16 %v315
    %v662 = vunpack.c.l.b16 %v316
    %v663 = vunpack.c.h.b16 %v316
    %v664 = vunpack.c.l.b16 %v317
    %v665 = vunpack.c.h.b16 %v317
    %v666 = vunpack.c.l.b16 %v318
    %v667 = vunpack.c.h.b16 %v318
    %v668 = vunpack.c.l.b16 %v319
    %v669 = vunpack.c.h.b16 %v319
    %v670 = vunpack.c.l.b16 %v320
    %v671 = vunpack.c.h.b16 %v320
    %v672 = vunpack.c.l.b16 %v321
    %v673 = vunpack.c.h.b16 %v321
    %v674 = vunpack.c.l.b16 %v322
    %v675 = vunpack.c.h.b16 %v322
    %v676 = vunpack.c.l.b16 %v323
    %v677 = vunpack.c.h.b16 %v323
    %v678 = vunpack.c.l.b16 %v324
    %v679 = vunpack.c.h.b16 %v324
    %v680 = vunpack.c.l.b16 %v325
    %v681 = vunpack.c.h.b16 %v325
    %v682 = vunpack.c.l.b16 %v326
    %v683 = vunpack.c.h.b16 %v326
    %v684 = vunpack.c.l.b16 %v327
    %v685 = vunpack.c.h.b16 %v327
    %v686 = vunpack.c.l.b16 %v328
    %v687 = vunpack.c.h.b16 %v328
    %v688 = vunpack.c.l.b16 %v329
    %v689 = vunpack.c.h.b16 %v329
    %v690 = vunpack.c.l.b16 %v330
    %v691 = vunpack.c.h.b16 %v330
    %v692 = vunpack.c.l.b16 %v331
    %v693 = vunpack.c.h.b16 %v331
    %v694 = vunpack.c.l.b16 %v332
    %v695 = vunpack.c.h.b16 %v332
    %v696 = vunpack.c.l.b16 %v333
    %v697 = vunpack.c.h.b16 %v333
    %v698 = vunpack.c.l.b16 %v334
    %v699 = vunpack.c.h.b16 %v334
    %v700 = vunpack.c.l.b16 %v335
    %v701 = vunpack.c.h.b16 %v335
    %v702 = vunpack.c.l.b16 %v336
    %v703 = vunpack.c.h.b16 %v336
    %v704 = vunpack.c.l.b16 %v337
    %v705 = vunpack.c.h.b16 %v337
    %v706 = vunpack.c.l.b16 %v338
    %v707 = vunpack.c.h.b16 %v338
    %v708 = vunpack.c.l.b16 %v339
    %v709 = vunpack.c.h.b16 %v339
    %v710 = vunpack.c.l.b16 %v340
    %v711 = vunpack.c.h.b16 %v340
    %v712 = vunpack.c.l.b16 %v341
    %v713 = vunpack.c.h.b16 %v341
    %v714 = vunpack.c.l.b16 %v342
    %v715 = vunpack.c.h.b16 %v342
    %v716 = vunpack.c.l.b16 %v343
    %v717 = vunpack.c.h.b16 %v343
    %v718 = vunpack.c.l.b16 %v344
    %v719 = vunpack.c.h.b16 %v344
    %v720 = vunpack.c.l.b16 %v345
    %v721 = vunpack.c.h.b16 %v345
    %v722 = vunpack.c.l.b16 %v346
    %v723 = vunpack.c.h.b16 %v346
    %v724 = vunpack.c.l.b16 %v347
    %v725 = vunpack.c.h.b16 %v347
    %v726 = vunpack.c.l.b16 %v348
    %v727 = vunpack.c.h.b16 %v348
    %v728 = vunpack.c.l.b16 %v349
    %v729 = vunpack.c.h.b16 %v349
    %v730 = vunpack.c.l.b16 %v350
    %v731 = vunpack.c.h.b16 %v350
    %v732 = vunpack.c.l.b16 %v351
    %v733 = vunpack.c.h.b16 %v351
    %v734 = vunpack.c.l.b16 %v352
    %v735 = vunpack.c.h.b16 %v352
    %v736 = vunpack.c.l.b16 %v353
    %v737 = vunpack.c.h.b16 %v353
    %v738 = vunpack.c.l.b16 %v354
    %v739 = vunpack.c.h.b16 %v354
    %v740 = vunpack.c.l.b16 %v355
    %v741 = vunpack.c.h.b16 %v355
    %v742 = vunpack.c.l.b16 %v356
    %v743 = vunpack.c.h.b16 %v356
    %v744 = vunpack.c.l.b16 %v357
    %v745 = vunpack.c.h.b16 %v357
    %v746 = vunpack.c.l.b16 %v358
    %v747 = vunpack.c.h.b16 %v358
    %v748 = vunpack.c.l.b16 %v359
    %v749 = vunpack.c.h.b16 %v359
    %v750 = vunpack.c.l.b16 %v360
    %v751 = vunpack.c.h.b16 %v360
    %v752 = vunpack.c.l.b16 %v361
    %v753 = vunpack.c.h.b16 %v361
    %v754 = vunpack.c.l.b16 %v362
    %v755 = vunpack.c.h.b16 %v362
    %v756 = vunpack.c.l.b16 %v363
    %v757 = vunpack.c.h.b16 %v363
    %v758 = vunpack.c.l.b16 %v364
    %v759 = vunpack.c.h.b16 %v364
    %v760 = vunpack.c.l.b16 %v365
    %v761 = vunpack.c.h.b16 %v365
    %v762 = vunpack.c.l.b16 %v366
    %v763 = vunpack.c.h.b16 %v366
    %v764 = vunpack.c.l.b16 %v367
    %v765 = vunpack.c.h.b16 %v367
    %v766 = vunpack.c.l.b16 %v368
    %v767 = vunpack.c.h.b16 %v368
    %v768 = vunpack.c.l.b16 %v369
    %v769 = vunpack.c.h.b16 %v369
    %v770 = vunpack.c.l.b16 %v370
    %v771 = vunpack.c.h.b16 %v370
    %v772 = vunpack.c.l.b16 %v371
    %v773 = vunpack.c.h.b16 %v371
    %v774 = vunpack.c.l.b16 %v372
    %v775 = vunpack.c.h.b16 %v372
    %v776 = vunpack.c.l.b16 %v373
    %v777 = vunpack.c.h.b16 %v373
    %v778 = vunpack.c.l.b16 %v374
    %v779 = vunpack.c.h.b16 %v374
    %v780 = vunpack.c.l.b16 %v375
    %v781 = vunpack.c.h.b16 %v375
    %v782 = vpack.c.b16 %v530, %v526
    %v783 = vpack.c.b16 %v531, %v527
    %v784 = vpack.c.b16 %v532, %v528
    %v785 = vpack.c.b16 %v533, %v529
    %v786 = vpack.c.b16 %v538, %v534
    %v787 = vpack.c.b16 %v539, %v535
    %v788 = vpack.c.b16 %v540, %v536
    %v789 = vpack.c.b16 %v541, %v537
    %v790 = vpack.c.b16 %v546, %v542
    %v791 = vpack.c.b16 %v547, %v543
    %v792 = vpack.c.b16 %v548, %v544
    %v793 = vpack.c.b16 %v549, %v545
    %v794 = vpack.c.b16 %v554, %v550
    %v795 = vpack.c.b16 %v555, %v551
    %v796 = vpack.c.b16 %v556, %v552
    %v797 = vpack.c.b16 %v557, %v553
    %v798 = vpack.c.b16 %v562, %v558
    %v799 = vpack.c.b16 %v563, %v559
    %v800 = vpack.c.b16 %v564, %v560
    %v801 = vpack.c.b16 %v565, %v561
    %v802 = vpack.c.b16 %v570, %v566
    %v803 = vpack.c.b16 %v571, %v567
    %v804 = vpack.c.b16 %v572, %v568
    %v805 = vpack.c.b16 %v573, %v569
    %v806 = vpack.c.b16 %v578, %v574
    %v807 = vpack.c.b16 %v579, %v575
    %v808 = vpack.c.b16 %v580, %v576
    %v809 = vpack.c.b16 %v581, %v577
    %v810 = vpack.c.b16 %v586, %v582
    %v811 = vpack.c.b16 %v587, %v583
    %v812 = vpack.c.b16 %v588, %v584
    %v813 = vpack.c.b16 %v589, %v585
    %v814 = vpack.c.b16 %v594, %v590
    %v815 = vpack.c.b16 %v595, %v591
    %v816 = vpack.c.b16 %v596, %v592
    %v817 = vpack.c.b16 %v597, %v593
    %v818 = vpack.c.b16 %v602, %v598
    %v819 = vpack.c.b16 %v603, %v599
    %v820 = vpack.c.b16 %v604, %v600
    %v821 = vpack.c.b16 %v605, %v601
    %v822 = vpack.c.b16 %v610, %v606
    %v823 = vpack.c.b16 %v611, %v607
    %v824 = vpack.c.b16 %v612, %v608
    %v825 = vpack.c.b16 %v613, %v609
    %v826 = vpack.c.b16 %v618, %v614
    %v827 = vpack.c.b16 %v619, %v615
    %v828 = vpack.c.b16 %v620, %v616
    %v829 = vpack.c.b16 %v621, %v617
    %v830 = vpack.c.b16 %v626, %v622
    %v831 = vpack.c.b16 %v627, %v623
    %v832 = vpack.c.b16 %v628, %v624
    %v833 = vpack.c.b16 %v629, %v625
    %v834 = vpack.c.b16 %v634, %v630
    %v835 = vpack.c.b16 %v635, %v631
    %v836 = vpack.c.b16 %v636, %v632
    %v837 = vpack.c.b16 %v637, %v633
    %v838 = vpack.c.b16 %v642, %v638
    %v839 = vpack.c.b16 %v643, %v639
    %v840 = vpack.c.b16 %v644, %v640
    %v841 = vpack.c.b16 %v645, %v641
    %v842 = vpack.c.b16 %v650, %v646
    %v843 = vpack.c.b16 %v651, %v647
    %v844 = vpack.c.b16 %v652, %v648
    %v845 = vpack.c.b16 %v653, %v649
    %v846 = vpack.c.b16 %v658, %v654
    %v847 = vpack.c.b16 %v659, %v655
    %v848 = vpack.c.b16 %v660, %v656
    %v849 = vpack.c.b16 %v661, %v657
    %v850 = vpack.c.b16 %v666, %v662
    %v851 = vpack.c.b16 %v667, %v663
    %v852 = vpack.c.b16 %v668, %v664
    %v853 = vpack.c.b16 %v669, %v665
    %v854 = vpack.c.b16 %v674, %v670
    %v855 = vpack.c.b16 %v675, %v671
    %v856 = vpack.c.b16 %v676, %v672
    %v857 = vpack.c.b16 %v677, %v673
    %v858 = vpack.c.b16 %v682, %v678
    %v859 = vpack.c.b16 %v683, %v679
    %v860 = vpack.c.b16 %v684, %v680
    %v861 = vpack.c.b16 %v685, %v681
    %v862 = vpack.c.b16 %v690, %v686
    %v863 = vpack.c.b16 %v691, %v687
    %v864 = vpack.c.b16 %v692, %v688
    %v865 = vpack.c.b16 %v693, %v689
    %v866 = vpack.c.b16 %v698, %v694
    %v867 = vpack.c.b16 %v699, %v695
    %v868 = vpack.c.b16 %v700, %v696
    %v869 = vpack.c.b16 %v701, %v697
    %v870 = vpack.c.b16 %v706, %v702
    %v871 = vpack.c.b16 %v707, %v703
    %v872 = vpack.c.b16 %v708, %v704
    %v873 = vpack.c.b16 %v709, %v705
    %v874 = vpack.c.b16 %v714, %v710
    %v875 = vpack.c.b16 %v715, %v711
    %v876 = vpack.c.b16 %v716, %v712
    %v877 = vpack.c.b16 %v717, %v713
    %v878 = vpack.c.b16 %v722, %v718
    %v879 = vpack.c.b16 %v723, %v719
    %v880 = vpack.c.b16 %v724, %v720
    %v881 = vpack.c.b16 %v725, %v721
    %v882 = vpack.c.b16 %v730, %v726
    %v883 = vpack.c.b16 %v731, %v727
    %v884 = vpack.c.b16 %v732, %v728
    %v885 = vpack.c.b16 %v733, %v729
    %v886 = vpack.c.b16 %v738, %v734
    %v887 = vpack.c.b16 %v739, %v735
    %v888 = vpack.c.b16 %v740, %v736
    %v889 = vpack.c.b16 %v741, %v737
    %v890 = vpack.c.b16 %v746, %v742
    %v891 = vpack.c.b16 %v747, %v743
    %v892 = vpack.c.b16 %v748, %v744
    %v893 = vpack.c.b16 %v749, %v745
    %v894 = vpack.c.b16 %v754, %v750
    %v895 = vpack.c.b16 %v755, %v751
    %v896 = vpack.c.b16 %v756, %v752
    %v897 = vpack.c.b16 %v757, %v753
    %v898 = vpack.c.b16 %v762, %v758
    %v899 = vpack.c.b16 %v763, %v759
    %v900 = vpack.c.b16 %v764, %v760
    %v901 = vpack.c.b16 %v765, %v761
    %v902 = vpack.c.b16 %v770, %v766
    %v903 = vpack.c.b16 %v771, %v767
    %v904 = vpack.c.b16 %v772, %v768
    %v905 = vpack.c.b16 %v773, %v769
    %v906 = vpack.c.b16 %v778, %v774
    %v907 = vpack.c.b16 %v779, %v775
    %v908 = vpack.c.b16 %v780, %v776
    %v909 = vpack.c.b16 %v781, %v777
    %1038 = vmatprep.subr.bf16.mxu0 %v783
    %1039 = vmatpush1.bf16.msra.mxu0 %v782
    %1040 = vmatprep.subr.bf16.mxu0 %v787
    %1041 = vmatpush1.bf16.msra.mxu0 %v786
    %1042 = vmatprep.subr.bf16.mxu0 %v791
    %1043 = vmatpush1.bf16.msra.mxu0 %v790
    %1044 = vmatprep.subr.bf16.mxu0 %v795
    %1045 = vmatpush1.bf16.msra.mxu0 %v794
    %1046 = vmatprep.subr.bf16.mxu0 %v799
    %1047 = vmatpush1.bf16.msra.mxu0 %v798
    %1048 = vmatprep.subr.bf16.mxu0 %v803
    %1049 = vmatpush1.bf16.msra.mxu0 %v802
    %1050 = vmatprep.subr.bf16.mxu0 %v807
    %1051 = vmatpush1.bf16.msra.mxu0 %v806
    %1052 = vmatprep.subr.bf16.mxu0 %v811
    %1053 = vmatpush1.bf16.msra.mxu0 %v810
    %1054 = vmatprep.subr.bf16.mxu0 %v815
    %1055 = vmatpush1.bf16.msra.mxu0 %v814
    %1056 = vmatprep.subr.bf16.mxu0 %v819
    %1057 = vmatpush1.bf16.msra.mxu0 %v818
    %1058 = vmatprep.subr.bf16.mxu0 %v823
    %1059 = vmatpush1.bf16.msra.mxu0 %v822
    %1060 = vmatprep.subr.bf16.mxu0 %v827
    %1061 = vmatpush1.bf16.msra.mxu0 %v826
    %1062 = vmatprep.subr.bf16.mxu0 %v831
    %1063 = vmatpush1.bf16.msra.mxu0 %v830
    %1064 = vmatprep.subr.bf16.mxu0 %v835
    %1065 = vmatpush1.bf16.msra.mxu0 %v834
    %1066 = vmatprep.subr.bf16.mxu0 %v839
    %1067 = vmatpush1.bf16.msra.mxu0 %v838
    %1068 = vmatprep.subr.bf16.mxu0 %v843
    %1069 = vmatpush1.bf16.msra.mxu0 %v842
    %1070 = vmatprep.mubr.bf16.mxu0 %v245
    %1071 = vmatmul.mubr.bf16.gmra.mrb[0].mxu0 %v244
    %v1072 = vpop.f32.mrb[0].mxu0
    %v1073 = vadd.f32 %v381, %v1072
    %v1074 = vpop.f32.mrb[0].mxu0
    %v1075 = vadd.f32 %v385, %v1074
    %v1076 = vpop.f32.mrb[0].mxu0
    %v1077 = vpop.f32.mrb[0].mxu0
    %1078 = vdwg.mxu0
    %1079 = vmatprep.subr.bf16.mxu0 %v847
    %1080 = vmatpush1.bf16.msra.mxu0 %v846
    %1081 = vmatprep.subr.bf16.mxu0 %v851
    %1082 = vmatpush1.bf16.msra.mxu0 %v850
    %1083 = vmatprep.subr.bf16.mxu0 %v855
    %1084 = vmatpush1.bf16.msra.mxu0 %v854
    %1085 = vmatprep.subr.bf16.mxu0 %v859
    %1086 = vmatpush1.bf16.msra.mxu0 %v858
    %1087 = vmatprep.subr.bf16.mxu0 %v863
    %1088 = vmatpush1.bf16.msra.mxu0 %v862
    %1089 = vmatprep.subr.bf16.mxu0 %v867
    %1090 = vmatpush1.bf16.msra.mxu0 %v866
    %1091 = vmatprep.subr.bf16.mxu0 %v871
    %1092 = vmatpush1.bf16.msra.mxu0 %v870
    %1093 = vmatprep.subr.bf16.mxu0 %v875
    %1094 = vmatpush1.bf16.msra.mxu0 %v874
    %1095 = vmatprep.subr.bf16.mxu0 %v879
    %1096 = vmatpush1.bf16.msra.mxu0 %v878
    %1097 = vmatprep.subr.bf16.mxu0 %v883
    %1098 = vmatpush1.bf16.msra.mxu0 %v882
    %1099 = vmatprep.subr.bf16.mxu0 %v887
    %1100 = vmatpush1.bf16.msra.mxu0 %v886
    %1101 = vmatprep.subr.bf16.mxu0 %v891
    %1102 = vmatpush1.bf16.msra.mxu0 %v890
    %1103 = vmatprep.subr.bf16.mxu0 %v895
    %1104 = vmatpush1.bf16.msra.mxu0 %v894
    %1105 = vmatprep.subr.bf16.mxu0 %v899
    %1106 = vmatpush1.bf16.msra.mxu0 %v898
    %1107 = vmatprep.subr.bf16.mxu0 %v903
    %1108 = vmatpush1.bf16.msra.mxu0 %v902
    %1109 = vmatprep.subr.bf16.mxu0 %v907
    %1110 = vmatpush1.bf16.msra.mxu0 %v906
    %1111 = vmatprep.mubr.bf16.mxu0 %v247
    %1112 = vmatmul.mubr.bf16.gmra.mrb[0].mxu0 %v246
    %v1113 = vpop.f32.mrb[0].mxu0
    %v1114 = vadd.f32 %v1073, %v1113
    %v1115 = vpop.f32.mrb[0].mxu0
    %v1116 = vadd.f32 %v1075, %v1115
    %v1117 = vpop.f32.mrb[0].mxu0
    %v1118 = vpop.f32.mrb[0].mxu0
    %1119 = vdwg.mxu0
    %1120 = vmatprep.subr.bf16.mxu0 %v785
    %1121 = vmatpush1.bf16.msra.mxu0 %v784
    %1122 = vmatprep.subr.bf16.mxu0 %v789
    %1123 = vmatpush1.bf16.msra.mxu0 %v788
    %1124 = vmatprep.subr.bf16.mxu0 %v793
    %1125 = vmatpush1.bf16.msra.mxu0 %v792
    %1126 = vmatprep.subr.bf16.mxu0 %v797
    %1127 = vmatpush1.bf16.msra.mxu0 %v796
    %1128 = vmatprep.subr.bf16.mxu0 %v801
    %1129 = vmatpush1.bf16.msra.mxu0 %v800
    %1130 = vmatprep.subr.bf16.mxu0 %v805
    %1131 = vmatpush1.bf16.msra.mxu0 %v804
    %1132 = vmatprep.subr.bf16.mxu0 %v809
    %1133 = vmatpush1.bf16.msra.mxu0 %v808
    %1134 = vmatprep.subr.bf16.mxu0 %v813
    %1135 = vmatpush1.bf16.msra.mxu0 %v812
    %1136 = vmatprep.subr.bf16.mxu0 %v817
    %1137 = vmatpush1.bf16.msra.mxu0 %v816
    %1138 = vmatprep.subr.bf16.mxu0 %v821
    %1139 = vmatpush1.bf16.msra.mxu0 %v820
    %1140 = vmatprep.subr.bf16.mxu0 %v825
    %1141 = vmatpush1.bf16.msra.mxu0 %v824
    %1142 = vmatprep.subr.bf16.mxu0 %v829
    %1143 = vmatpush1.bf16.msra.mxu0 %v828
    %1144 = vmatprep.subr.bf16.mxu0 %v833
    %1145 = vmatpush1.bf16.msra.mxu0 %v832
    %1146 = vmatprep.subr.bf16.mxu0 %v837
    %1147 = vmatpush1.bf16.msra.mxu0 %v836
    %1148 = vmatprep.subr.bf16.mxu0 %v841
    %1149 = vmatpush1.bf16.msra.mxu0 %v840
    %1150 = vmatprep.subr.bf16.mxu0 %v845
    %1151 = vmatpush1.bf16.msra.mxu0 %v844
    %1152 = vmatprep.mubr.bf16.mxu0 %v245
    %1153 = vmatmul.mubr.bf16.gmra.mrb[0].mxu0 %v244
    %v1154 = vpop.f32.mrb[0].mxu0
    %v1155 = vadd.f32 %v389, %v1154
    %v1156 = vpop.f32.mrb[0].mxu0
    %v1157 = vadd.f32 %v393, %v1156
    %v1158 = vpop.f32.mrb[0].mxu0
    %v1159 = vpop.f32.mrb[0].mxu0
    %1160 = vdwg.mxu0
    %1161 = vmatprep.subr.bf16.mxu0 %v849
    %1162 = vmatpush1.bf16.msra.mxu0 %v848
    %1163 = vmatprep.subr.bf16.mxu0 %v853
    %1164 = vmatpush1.bf16.msra.mxu0 %v852
    %1165 = vmatprep.subr.bf16.mxu0 %v857
    %1166 = vmatpush1.bf16.msra.mxu0 %v856
    %1167 = vmatprep.subr.bf16.mxu0 %v861
    %1168 = vmatpush1.bf16.msra.mxu0 %v860
    %1169 = vmatprep.subr.bf16.mxu0 %v865
    %1170 = vmatpush1.bf16.msra.mxu0 %v864
    %1171 = vmatprep.subr.bf16.mxu0 %v869
    %1172 = vmatpush1.bf16.msra.mxu0 %v868
    %1173 = vmatprep.subr.bf16.mxu0 %v873
    %1174 = vmatpush1.bf16.msra.mxu0 %v872
    %1175 = vmatprep.subr.bf16.mxu0 %v877
    %1176 = vmatpush1.bf16.msra.mxu0 %v876
    %1177 = vmatprep.subr.bf16.mxu0 %v881
    %1178 = vmatpush1.bf16.msra.mxu0 %v880
    %1179 = vmatprep.subr.bf16.mxu0 %v885
    %1180 = vmatpush1.bf16.msra.mxu0 %v884
    %1181 = vmatprep.subr.bf16.mxu0 %v889
    %1182 = vmatpush1.bf16.msra.mxu0 %v888
    %1183 = vmatprep.subr.bf16.mxu0 %v893
    %1184 = vmatpush1.bf16.msra.mxu0 %v892
    %1185 = vmatprep.subr.bf16.mxu0 %v897
    %1186 = vmatpush1.bf16.msra.mxu0 %v896
    %1187 = vmatprep.subr.bf16.mxu0 %v901
    %1188 = vmatpush1.bf16.msra.mxu0 %v900
    %1189 = vmatprep.subr.bf16.mxu0 %v905
    %1190 = vmatpush1.bf16.msra.mxu0 %v904
    %1191 = vmatprep.subr.bf16.mxu0 %v909
    %1192 = vmatpush1.bf16.msra.mxu0 %v908
    %1193 = vmatprep.mubr.bf16.mxu0 %v247
    %1194 = vmatmul.mubr.bf16.gmra.mrb[0].mxu0 %v246
    %v1195 = vpop.f32.mrb[0].mxu0
    %v1196 = vadd.f32 %v1155, %v1195
    %v1197 = vpop.f32.mrb[0].mxu0
    %v1198 = vadd.f32 %v1157, %v1197
    %v1199 = vpop.f32.mrb[0].mxu0
    %v1200 = vpop.f32.mrb[0].mxu0
    %1201 = vdwg.mxu0
    %v1202 = vmax.f32 %v1114, 0.0
    %v1203 = vmax.f32 %v1116, 0.0
    %v1204 = vmax.f32 %v1196, 0.0
    %v1205 = vmax.f32 %v1198, 0.0
    %v1206 = vpack.c.bf16 %v1202, %v1202
    %v1207 = vpack.c.bf16 %v1203, %v1203
    %v1208 = vpack.c.bf16 %v1204, %v1204
    %v1209 = vpack.c.bf16 %v1205, %v1205
    %v1210 = vld [vmem:[#allocation10] sm:$0xf]
    %v1211 = vld [vmem:[#allocation10 + $0x4] sm:$0xf]
    %v1212 = vld [vmem:[#allocation10 + $0x8] sm:$0xf]
    %v1213 = vld [vmem:[#allocation10 + $0xc] sm:$0xf]
    %v1214 = vld [vmem:[#allocation10 + $0x10] sm:$0xf]
    %v1215 = vld [vmem:[#allocation10 + $0x14] sm:$0xf]
    %v1216 = vld [vmem:[#allocation10 + $0x18] sm:$0xf]
    %v1217 = vld [vmem:[#allocation10 + $0x1c] sm:$0xf]
    %v1218 = vld [vmem:[#allocation10 + $0x20] sm:$0xf]
    %v1219 = vld [vmem:[#allocation10 + $0x24] sm:$0xf]
    %v1220 = vld [vmem:[#allocation10 + $0x28] sm:$0xf]
    %v1221 = vld [vmem:[#allocation10 + $0x2c] sm:$0xf]
    %v1222 = vld [vmem:[#allocation10 + $0x30] sm:$0xf]
    %v1223 = vld [vmem:[#allocation10 + $0x34] sm:$0xf]
    %v1224 = vld [vmem:[#allocation10 + $0x38] sm:$0xf]
    %v1225 = vld [vmem:[#allocation10 + $0x3c] sm:$0xf]
    %v1226 = vld [vmem:[#allocation10 + $0x40] sm:$0xf]
    %v1227 = vld [vmem:[#allocation10 + $0x44] sm:$0xf]
    %v1228 = vld [vmem:[#allocation10 + $0x48] sm:$0xf]
    %v1229 = vld [vmem:[#allocation10 + $0x4c] sm:$0xf]
    %v1230 = vld [vmem:[#allocation10 + $0x50] sm:$0xf]
    %v1231 = vld [vmem:[#allocation10 + $0x54] sm:$0xf]
    %v1232 = vld [vmem:[#allocation10 + $0x58] sm:$0xf]
    %v1233 = vld [vmem:[#allocation10 + $0x5c] sm:$0xf]
    %v1234 = vld [vmem:[#allocation10 + $0x60] sm:$0xf]
    %v1235 = vld [vmem:[#allocation10 + $0x64] sm:$0xf]
    %v1236 = vld [vmem:[#allocation10 + $0x68] sm:$0xf]
    %v1237 = vld [vmem:[#allocation10 + $0x6c] sm:$0xf]
    %v1238 = vld [vmem:[#allocation10 + $0x70] sm:$0xf]
    %v1239 = vld [vmem:[#allocation10 + $0x74] sm:$0xf]
    %v1240 = vld [vmem:[#allocation10 + $0x78] sm:$0xf]
    %v1241 = vld [vmem:[#allocation10 + $0x7c] sm:$0xf]
    %v1242 = vld [vmem:[#allocation10 + $0x80] sm:$0xf]
    %v1243 = vld [vmem:[#allocation10 + $0x84] sm:$0xf]
    %v1244 = vld [vmem:[#allocation10 + $0x88] sm:$0xf]
    %v1245 = vld [vmem:[#allocation10 + $0x8c] sm:$0xf]
    %v1246 = vld [vmem:[#allocation10 + $0x90] sm:$0xf]
    %v1247 = vld [vmem:[#allocation10 + $0x94] sm:$0xf]
    %v1248 = vld [vmem:[#allocation10 + $0x98] sm:$0xf]
    %v1249 = vld [vmem:[#allocation10 + $0x9c] sm:$0xf]
    %v1250 = vld [vmem:[#allocation10 + $0xa0] sm:$0xf]
    %v1251 = vld [vmem:[#allocation10 + $0xa4] sm:$0xf]
    %v1252 = vld [vmem:[#allocation10 + $0xa8] sm:$0xf]
    %v1253 = vld [vmem:[#allocation10 + $0xac] sm:$0xf]
    %v1254 = vld [vmem:[#allocation10 + $0xb0] sm:$0xf]
    %v1255 = vld [vmem:[#allocation10 + $0xb4] sm:$0xf]
    %v1256 = vld [vmem:[#allocation10 + $0xb8] sm:$0xf]
    %v1257 = vld [vmem:[#allocation10 + $0xbc] sm:$0xf]
    %v1258 = vld [vmem:[#allocation10 + $0xc0] sm:$0xf]
    %v1259 = vld [vmem:[#allocation10 + $0xc4] sm:$0xf]
    %v1260 = vld [vmem:[#allocation10 + $0xc8] sm:$0xf]
    %v1261 = vld [vmem:[#allocation10 + $0xcc] sm:$0xf]
    %v1262 = vld [vmem:[#allocation10 + $0xd0] sm:$0xf]
    %v1263 = vld [vmem:[#allocation10 + $0xd4] sm:$0xf]
    %v1264 = vld [vmem:[#allocation10 + $0xd8] sm:$0xf]
    %v1265 = vld [vmem:[#allocation10 + $0xdc] sm:$0xf]
    %v1266 = vld [vmem:[#allocation10 + $0xe0] sm:$0xf]
    %v1267 = vld [vmem:[#allocation10 + $0xe4] sm:$0xf]
    %v1268 = vld [vmem:[#allocation10 + $0xe8] sm:$0xf]
    %v1269 = vld [vmem:[#allocation10 + $0xec] sm:$0xf]
    %v1270 = vld [vmem:[#allocation10 + $0xf0] sm:$0xf]
    %v1271 = vld [vmem:[#allocation10 + $0xf4] sm:$0xf]
    %v1272 = vld [vmem:[#allocation10 + $0xf8] sm:$0xf]
    %v1273 = vld [vmem:[#allocation10 + $0xfc] sm:$0xf]
    %v1274 = vld [vmem:[%s7] sm:$0x1]
    %v1276 = vlaneseq
    %v1277 = vshrl.u32 %v1276, 7
    %v1278 = vsub.s32 0, %v1277
    %v1279 = vrot.slane %v1274, %v1278
    %v1345 = vunpack.c.l.b16 %v1210
    %v1346 = vunpack.c.l.b16 %v1211
    %v1347 = vunpack.c.l.b16 %v1212
    %v1348 = vunpack.c.l.b16 %v1213
    %v1349 = vunpack.c.l.b16 %v1214
    %v1350 = vunpack.c.l.b16 %v1215
    %v1351 = vunpack.c.l.b16 %v1216
    %v1352 = vunpack.c.l.b16 %v1217
    %v1353 = vunpack.c.l.b16 %v1218
    %v1354 = vunpack.c.l.b16 %v1219
    %v1355 = vunpack.c.l.b16 %v1220
    %v1356 = vunpack.c.l.b16 %v1221
    %v1357 = vunpack.c.l.b16 %v1222
    %v1358 = vunpack.c.l.b16 %v1223
    %v1359 = vunpack.c.l.b16 %v1224
    %v1360 = vunpack.c.l.b16 %v1225
    %v1361 = vunpack.c.l.b16 %v1226
    %v1362 = vunpack.c.l.b16 %v1227
    %v1363 = vunpack.c.l.b16 %v1228
    %v1364 = vunpack.c.l.b16 %v1229
    %v1365 = vunpack.c.l.b16 %v1230
    %v1366 = vunpack.c.l.b16 %v1231
    %v1367 = vunpack.c.l.b16 %v1232
    %v1368 = vunpack.c.l.b16 %v1233
    %v1369 = vunpack.c.l.b16 %v1234
    %v1370 = vunpack.c.l.b16 %v1235
    %v1371 = vunpack.c.l.b16 %v1236
    %v1372 = vunpack.c.l.b16 %v1237
    %v1373 = vunpack.c.l.b16 %v1238
    %v1374 = vunpack.c.l.b16 %v1239
    %v1375 = vunpack.c.l.b16 %v1240
    %v1376 = vunpack.c.l.b16 %v1241
    %v1377 = vunpack.c.l.b16 %v1242
    %v1378 = vunpack.c.l.b16 %v1243
    %v1379 = vunpack.c.l.b16 %v1244
    %v1380 = vunpack.c.l.b16 %v1245
    %v1381 = vunpack.c.l.b16 %v1246
    %v1382 = vunpack.c.l.b16 %v1247
    %v1383 = vunpack.c.l.b16 %v1248
    %v1384 = vunpack.c.l.b16 %v1249
    %v1385 = vunpack.c.l.b16 %v1250
    %v1386 = vunpack.c.l.b16 %v1251
    %v1387 = vunpack.c.l.b16 %v1252
    %v1388 = vunpack.c.l.b16 %v1253
    %v1389 = vunpack.c.l.b16 %v1254
    %v1390 = vunpack.c.l.b16 %v1255
    %v1391 = vunpack.c.l.b16 %v1256
    %v1392 = vunpack.c.l.b16 %v1257
    %v1393 = vunpack.c.l.b16 %v1258
    %v1394 = vunpack.c.l.b16 %v1259
    %v1395 = vunpack.c.l.b16 %v1260
    %v1396 = vunpack.c.l.b16 %v1261
    %v1397 = vunpack.c.l.b16 %v1262
    %v1398 = vunpack.c.l.b16 %v1263
    %v1399 = vunpack.c.l.b16 %v1264
    %v1400 = vunpack.c.l.b16 %v1265
    %v1401 = vunpack.c.l.b16 %v1266
    %v1402 = vunpack.c.l.b16 %v1267
    %v1403 = vunpack.c.l.b16 %v1268
    %v1404 = vunpack.c.l.b16 %v1269
    %v1405 = vunpack.c.l.b16 %v1270
    %v1406 = vunpack.c.l.b16 %v1271
    %v1407 = vunpack.c.l.b16 %v1272
    %v1408 = vunpack.c.l.b16 %v1273
    %v1409 = vpack.c.b16 %v1346, %v1345
    %v1410 = vpack.c.b16 %v1348, %v1347
    %v1411 = vpack.c.b16 %v1350, %v1349
    %v1412 = vpack.c.b16 %v1352, %v1351
    %v1413 = vpack.c.b16 %v1354, %v1353
    %v1414 = vpack.c.b16 %v1356, %v1355
    %v1415 = vpack.c.b16 %v1358, %v1357
    %v1416 = vpack.c.b16 %v1360, %v1359
    %v1417 = vpack.c.b16 %v1362, %v1361
    %v1418 = vpack.c.b16 %v1364, %v1363
    %v1419 = vpack.c.b16 %v1366, %v1365
    %v1420 = vpack.c.b16 %v1368, %v1367
    %v1421 = vpack.c.b16 %v1370, %v1369
    %v1422 = vpack.c.b16 %v1372, %v1371
    %v1423 = vpack.c.b16 %v1374, %v1373
    %v1424 = vpack.c.b16 %v1376, %v1375
    %v1425 = vpack.c.b16 %v1378, %v1377
    %v1426 = vpack.c.b16 %v1380, %v1379
    %v1427 = vpack.c.b16 %v1382, %v1381
    %v1428 = vpack.c.b16 %v1384, %v1383
    %v1429 = vpack.c.b16 %v1386, %v1385
    %v1430 = vpack.c.b16 %v1388, %v1387
    %v1431 = vpack.c.b16 %v1390, %v1389
    %v1432 = vpack.c.b16 %v1392, %v1391
    %v1433 = vpack.c.b16 %v1394, %v1393
    %v1434 = vpack.c.b16 %v1396, %v1395
    %v1435 = vpack.c.b16 %v1398, %v1397
    %v1436 = vpack.c.b16 %v1400, %v1399
    %v1437 = vpack.c.b16 %v1402, %v1401
    %v1438 = vpack.c.b16 %v1404, %v1403
    %v1439 = vpack.c.b16 %v1406, %v1405
    %v1440 = vpack.c.b16 %v1408, %v1407
    %1473 = vmatprep.subr.bf16.mxu0 0
    %1474 = vmatpush1.bf16.msra.mxu0 %v1409
    %1475 = vmatprep.subr.bf16.mxu0 0
    %1476 = vmatpush1.bf16.msra.mxu0 %v1410
    %1477 = vmatprep.subr.bf16.mxu0 0
    %1478 = vmatpush1.bf16.msra.mxu0 %v1411
    %1479 = vmatprep.subr.bf16.mxu0 0
    %1480 = vmatpush1.bf16.msra.mxu0 %v1412
    %1481 = vmatprep.subr.bf16.mxu0 0
    %1482 = vmatpush1.bf16.msra.mxu0 %v1413
    %1483 = vmatprep.subr.bf16.mxu0 0
    %1484 = vmatpush1.bf16.msra.mxu0 %v1414
    %1485 = vmatprep.subr.bf16.mxu0 0
    %1486 = vmatpush1.bf16.msra.mxu0 %v1415
    %1487 = vmatprep.subr.bf16.mxu0 0
    %1488 = vmatpush1.bf16.msra.mxu0 %v1416
    %1489 = vmatprep.subr.bf16.mxu0 0
    %1490 = vmatpush1.bf16.msra.mxu0 %v1417
    %1491 = vmatprep.subr.bf16.mxu0 0
    %1492 = vmatpush1.bf16.msra.mxu0 %v1418
    %1493 = vmatprep.subr.bf16.mxu0 0
    %1494 = vmatpush1.bf16.msra.mxu0 %v1419
    %1495 = vmatprep.subr.bf16.mxu0 0
    %1496 = vmatpush1.bf16.msra.mxu0 %v1420
    %1497 = vmatprep.subr.bf16.mxu0 0
    %1498 = vmatpush1.bf16.msra.mxu0 %v1421
    %1499 = vmatprep.subr.bf16.mxu0 0
    %1500 = vmatpush1.bf16.msra.mxu0 %v1422
    %1501 = vmatprep.subr.bf16.mxu0 0
    %1502 = vmatpush1.bf16.msra.mxu0 %v1423
    %1503 = vmatprep.subr.bf16.mxu0 0
    %1504 = vmatpush1.bf16.msra.mxu0 %v1424
    %1505 = vmatprep.mubr.bf16.mxu0 %v1207
    %1506 = vmatmul.mubr.bf16.gmra.mrb[0].mxu0 %v1206
    %v1507 = vpop.f32.mrb[0].mxu0
    %v1508 = vadd.f32 %v1279, %v1507
    %v1509 = vpop.f32.mrb[0].mxu0
    %v1510 = vpop.f32.mrb[0].mxu0
    %v1511 = vpop.f32.mrb[0].mxu0
    %1512 = vdwg.mxu0
    %1513 = vmatprep.subr.bf16.mxu0 0
    %1514 = vmatpush1.bf16.msra.mxu0 %v1425
    %1515 = vmatprep.subr.bf16.mxu0 0
    %1516 = vmatpush1.bf16.msra.mxu0 %v1426
    %1517 = vmatprep.subr.bf16.mxu0 0
    %1518 = vmatpush1.bf16.msra.mxu0 %v1427
    %1519 = vmatprep.subr.bf16.mxu0 0
    %1520 = vmatpush1.bf16.msra.mxu0 %v1428
    %1521 = vmatprep.subr.bf16.mxu0 0
    %1522 = vmatpush1.bf16.msra.mxu0 %v1429
    %1523 = vmatprep.subr.bf16.mxu0 0
    %1524 = vmatpush1.bf16.msra.mxu0 %v1430
    %1525 = vmatprep.subr.bf16.mxu0 0
    %1526 = vmatpush1.bf16.msra.mxu0 %v1431
    %1527 = vmatprep.subr.bf16.mxu0 0
    %1528 = vmatpush1.bf16.msra.mxu0 %v1432
    %1529 = vmatprep.subr.bf16.mxu0 0
    %1530 = vmatpush1.bf16.msra.mxu0 %v1433
    %1531 = vmatprep.subr.bf16.mxu0 0
    %1532 = vmatpush1.bf16.msra.mxu0 %v1434
    %1533 = vmatprep.subr.bf16.mxu0 0
    %1534 = vmatpush1.bf16.msra.mxu0 %v1435
    %1535 = vmatprep.subr.bf16.mxu0 0
    %1536 = vmatpush1.bf16.msra.mxu0 %v1436
    %1537 = vmatprep.subr.bf16.mxu0 0
    %1538 = vmatpush1.bf16.msra.mxu0 %v1437
    %1539 = vmatprep.subr.bf16.mxu0 0
    %1540 = vmatpush1.bf16.msra.mxu0 %v1438
    %1541 = vmatprep.subr.bf16.mxu0 0
    %1542 = vmatpush1.bf16.msra.mxu0 %v1439
    %1543 = vmatprep.subr.bf16.mxu0 0
    %1544 = vmatpush1.bf16.msra.mxu0 %v1440
    %1545 = vmatprep.mubr.bf16.mxu0 %v1209
    %1546 = vmatmul.mubr.bf16.gmra.mrb[0].mxu0 %v1208
    %v1547 = vpop.f32.mrb[0].mxu0
    %v1548 = vadd.f32 %v1508, %v1547
    %v1549 = vpop.f32.mrb[0].mxu0
    %v1550 = vpop.f32.mrb[0].mxu0
    %v1551 = vpop.f32.mrb[0].mxu0
    %1552 = vdwg.mxu0
    %v1553 = vlaneseq
    %v1554 = vand.u32 %v1553, 127
    %vm1555 = vcmp.eq.s32.totalorder %v1554, 0
    %v1556 = vmul.f32 %v1548, 0.5
    %v1557 = vsel %vm1555, %v1556, %v1548
    %v1558 = vtanh.pop %v1557
    %v1559 = vmul.f32 %v1558, 0.5
    %v1560 = vadd.f32 %v1559, 0.5
    %v1561 = vstv %s95
    %v1562 = vmul.f32 %v1560, %v1561
    %vm1563 = vcmp.eq.s32.totalorder %v1554, 1
    %v1564 = vstv %s96
    %v1565 = vmul.f32 %v1558, %v1564
    %v1566 = vsel %vm1563, %v1565, %v1548
    %v1567 = vsel %vm1555, %v1562, %v1566
    %v1568 = vpack.c.bf16 %v1567, %v1567
    %1569 = vst [vmem:[#allocation12] sm:$0xf] %v1568
    // Predicated region
    $region54: #{tpu_custom_call.1} parent=1 // pred_check
      _
    $region55: #{tpu_custom_call.1} parent=1 // pred_check_branch
      %1571 = sbr.rel (0) target = $region57
    $region56: #{tpu_custom_call.1} parent=1 // pred_region
      %s1573 = ssub.s32 64, 64
      %1574 = vsyncadd [#allocation4], %s1573
      %s1576 = sshll.u32 [#allocation12], 4
      %s1577 = int_to_ptr.vmem [resolvable:$true] %s1576
      %1579 = dma.vmem_to_hbm [thread:$0]  %s1577, 64, %s8, [#allocation4]
    $region57: #{tpu_custom_call.1} parent=1 // pred_fallthru
      _
    // Predicated region
    $region58: #{tpu_custom_call.1} parent=1 // pred_check
      _
    $region59: #{tpu_custom_call.1} parent=1 // pred_check_branch
      %1581 = sbr.rel (0) target = $region61
    $region60: #{tpu_custom_call.1} parent=1 // pred_region
      %1582 = dma.done [#allocation4], 64
    $region61: #{tpu_custom_call.1} parent=1 // pred_fallthru
      _
    %1583 = vsyncpa [#allocation3], 1
    %1584 = vsyncpa [#allocation8], 1
    %1585 = vsyncpa [#allocation11], 1
    %1586 = vsyncpa [#allocation4], 1
    %1587 = vsyncpa [#allocation5], 1

// kernel: tpu_custom_call.1
$region0: #{tpu_custom_call.1}
  #allocation0 [shape = 'u32[]', space=smem, size = 0x4, offset = 0x4, fixed_abs, tag = 'smem constant byte address 0x4 - core index']
  #allocation1 [shape = 'u32[144,128]{1,0:T(1,128)}', space=vmem, size = 0x12000, scoped, tag = 'internal scratch']
  %s0 = inlined_call_operand.hbm [shape: f32[2], index: 0, kind: input, shape index: {}]
  %s1 = inlined_call_operand.hbm [shape: f32[8,14], index: 1, kind: input, shape index: {}]
  %s2 = inlined_call_operand.hbm [shape: bf16[14,512], index: 2, kind: input, shape index: {}]
  %s3 = inlined_call_operand.vmem [shape: f32[1,512], index: 3, kind: input, shape index: {}]
  %s4 = inlined_call_operand.hbm [shape: bf16[512,512], index: 4, kind: input, shape index: {}]
  %s5 = inlined_call_operand.vmem [shape: f32[1,512], index: 5, kind: input, shape index: {}]
  %s6 = inlined_call_operand.hbm [shape: bf16[512,128], index: 6, kind: input, shape index: {}]
  %s7 = inlined_call_operand.vmem [shape: f32[1,128], index: 7, kind: input, shape index: {}]
  %s8 = inlined_call_operand.hbm [shape: bf16[8,128], index: 8, kind: output, shape index: {}]
  %s9 = sld [smem:[#allocation0]]
  $region62: #{tpu_custom_call.1} parent=0
    _
  %s11 = ssub.s32 1, %s9
  %s12 = scalar_select 0, %s11, %s9
  $region1: #{tpu_custom_call.1} parent=0
    #allocation2 [shape = 'u8[512]{0}', space=smem, size = 0x200, scoped, tag = 'input window, operand 0, single buffered']
    #allocation3 [shape = 's32[1]{0}', space=sflag, size = 0x4, scoped, tag = 'scoped memory for tpu_custom_call.1']
    #allocation4 [shape = 's32[1]{0}', space=sflag, size = 0x4, scoped, tag = 'scoped memory for tpu_custom_call.1']
    #allocation5 [shape = 's32[1]{0}', space=sflag, size = 0x4, scoped, tag = 'scoped memory for tpu_custom_call.1']
    #allocation6 [shape = 'u8[4096]{0}', space=vmem, size = 0x1000, scoped, tag = 'input window, operand 1, single buffered']
    #allocation7 [shape = 'u8[16384]{0}', space=vmem, size = 0x4000, scoped, tag = 'input window, operand 2, single buffered']
    #allocation8 [shape = 's32[1]{0}', space=sflag, size = 0x4, scoped, tag = 'scoped memory for tpu_custom_call.1']
    #allocation9 [shape = 'u8[524288]{0}', space=vmem, size = 0x80000, scoped, tag = 'input window, operand 4, single buffered']
    #allocation10 [shape = 'u8[131072]{0}', space=vmem, size = 0x20000, scoped, tag = 'input window, operand 6, single buffered']
    #allocation11 [shape = 's32[1]{0}', space=sflag, size = 0x4, scoped, tag = 'scoped memory for tpu_custom_call.1']
    #allocation12 [shape = 'u8[2048]{0}', space=vmem, size = 0x800, scoped, tag = 'output window, operand 0, single buffered']
    %13 = vsyncpa [#allocation5], 0
    %14 = vsyncpa [#allocation3], 0
    %15 = vsyncpa [#allocation8], 0
    %16 = vsyncpa [#allocation11], 0
    %17 = vsyncpa [#allocation4], 0
    // Predicated region
    $region2: #{tpu_custom_call.1} parent=1 // pred_check
      _
    $region3: #{tpu_custom_call.1} parent=1 // pred_check_branch
      %19 = sbr.rel (0) target = $region5
    $region4: #{tpu_custom_call.1} parent=1 // pred_region
      %s21 = ssub.s32 16, 16
      %22 = vsyncadd [#allocation5], %s21
      %25 = dma.hbm_to_smem %s0, 16, [#allocation2], [#allocation5]
    $region5: #{tpu_custom_call.1} parent=1 // pred_fallthru
      _
    // Predicated region
    $region6: #{tpu_custom_call.1} parent=1 // pred_check
      _
    $region7: #{tpu_custom_call.1} parent=1 // pred_check_branch
      %27 = sbr.rel (0) target = $region9
    $region8: #{tpu_custom_call.1} parent=1 // pred_region
      %s29 = ssub.s32 128, 128
      %30 = vsyncadd [#allocation3], %s29
      %s32 = sshll.u32 [#allocation6], 4
      %s33 = int_to_ptr.vmem [resolvable:$true] %s32
      %35 = dma.hbm_to_vmem [thread:$0]  %s1, 128, %s33, [#allocation3]
    $region9: #{tpu_custom_call.1} parent=1 // pred_fallthru
      _
    // Predicated region
    $region10: #{tpu_custom_call.1} parent=1 // pred_check
      _
    $region11: #{tpu_custom_call.1} parent=1 // pred_check_branch
      %37 = sbr.rel (0) target = $region13
    $region12: #{tpu_custom_call.1} parent=1 // pred_region
      %s39 = ssub.s32 512, 512
      %40 = vsyncadd [#allocation8], %s39
      %s41 = sshll.u32 [#allocation7], 4
      %s42 = int_to_ptr.vmem [resolvable:$true] %s41
      %47 = dma.hbm_to_vmem [thread:$0]  %s2, 512, %s42, [#allocation8], 256, 256, 16
    $region13: #{tpu_custom_call.1} parent=1 // pred_fallthru
      _
    // Predicated region
    $region14: #{tpu_custom_call.1} parent=1 // pred_check
      _
    $region15: #{tpu_custom_call.1} parent=1 // pred_check_branch
      %49 = sbr.rel (0) target = $region17
    $region16: #{tpu_custom_call.1} parent=1 // pred_region
      _
    $region17: #{tpu_custom_call.1} parent=1 // pred_fallthru
      _
    // Predicated region
    $region18: #{tpu_custom_call.1} parent=1 // pred_check
      _
    $region19: #{tpu_custom_call.1} parent=1 // pred_check_branch
      %51 = sbr.rel (0) target = $region21
    $region20: #{tpu_custom_call.1} parent=1 // pred_region
      %s53 = ssub.s32 16384, 16384
      %54 = vsyncadd [#allocation8], %s53
      %s55 = sshll.u32 [#allocation9], 4
      %s56 = int_to_ptr.vmem [resolvable:$true] %s55
      %61 = dma.hbm_to_vmem [thread:$0]  %s4, 16384, %s56, [#allocation8], 256, 256, 16
    $region21: #{tpu_custom_call.1} parent=1 // pred_fallthru
      _
    // Predicated region
    $region22: #{tpu_custom_call.1} parent=1 // pred_check
      _
    $region23: #{tpu_custom_call.1} parent=1 // pred_check_branch
      %63 = sbr.rel (0) target = $region25
    $region24: #{tpu_custom_call.1} parent=1 // pred_region
      _
    $region25: #{tpu_custom_call.1} parent=1 // pred_fallthru
      _
    // Predicated region
    $region26: #{tpu_custom_call.1} parent=1 // pred_check
      _
    $region27: #{tpu_custom_call.1} parent=1 // pred_check_branch
      %65 = sbr.rel (0) target = $region29
    $region28: #{tpu_custom_call.1} parent=1 // pred_region
      %s67 = ssub.s32 4096, 4096
      %68 = vsyncadd [#allocation11], %s67
      %s69 = sshll.u32 [#allocation10], 4
      %s70 = int_to_ptr.vmem [resolvable:$true] %s69
      %75 = dma.hbm_to_vmem [thread:$0]  %s6, 4096, %s70, [#allocation11], 64, 64, 4
    $region29: #{tpu_custom_call.1} parent=1 // pred_fallthru
      _
    // Predicated region
    $region30: #{tpu_custom_call.1} parent=1 // pred_check
      _
    $region31: #{tpu_custom_call.1} parent=1 // pred_check_branch
      %77 = sbr.rel (0) target = $region33
    $region32: #{tpu_custom_call.1} parent=1 // pred_region
      _
    $region33: #{tpu_custom_call.1} parent=1 // pred_fallthru
      _
    // Predicated region
    $region34: #{tpu_custom_call.1} parent=1 // pred_check
      _
    $region35: #{tpu_custom_call.1} parent=1 // pred_check_branch
      %79 = sbr.rel (0) target = $region37
    $region36: #{tpu_custom_call.1} parent=1 // pred_region
      %80 = dma.done [#allocation5], 16
    $region37: #{tpu_custom_call.1} parent=1 // pred_fallthru
      _
    // Predicated region
    $region38: #{tpu_custom_call.1} parent=1 // pred_check
      _
    $region39: #{tpu_custom_call.1} parent=1 // pred_check_branch
      %82 = sbr.rel (0) target = $region41
    $region40: #{tpu_custom_call.1} parent=1 // pred_region
      %83 = dma.done [#allocation3], 128
    $region41: #{tpu_custom_call.1} parent=1 // pred_fallthru
      _
    // Predicated region
    $region42: #{tpu_custom_call.1} parent=1 // pred_check
      _
    $region43: #{tpu_custom_call.1} parent=1 // pred_check_branch
      %85 = sbr.rel (0) target = $region45
    $region44: #{tpu_custom_call.1} parent=1 // pred_region
      %86 = dma.done [#allocation8], 512
    $region45: #{tpu_custom_call.1} parent=1 // pred_fallthru
      _
    // Predicated region
    $region46: #{tpu_custom_call.1} parent=1 // pred_check
      _
    $region47: #{tpu_custom_call.1} parent=1 // pred_check_branch
      %88 = sbr.rel (0) target = $region49
    $region48: #{tpu_custom_call.1} parent=1 // pred_region
      %89 = dma.done [#allocation8], 16384
    $region49: #{tpu_custom_call.1} parent=1 // pred_fallthru
      _
    // Predicated region
    $region50: #{tpu_custom_call.1} parent=1 // pred_check
      _
    $region51: #{tpu_custom_call.1} parent=1 // pred_check_branch
      %91 = sbr.rel (0) target = $region53
    $region52: #{tpu_custom_call.1} parent=1 // pred_region
      %92 = dma.done [#allocation11], 4096
    $region53: #{tpu_custom_call.1} parent=1 // pred_fallthru
      _
    %93 = sfence
    %s95 = sld [smem:[#allocation2]]
    %s96 = sld [smem:[#allocation2 + $0x1]]
    %v97 = vld [vmem:[#allocation6] sm:$0xff]
    %v98 = vpack.c.bf16 %v97, %v97
    %v99 = vld [vmem:[#allocation7] sm:$0xff]
    %v100 = vld [vmem:[#allocation7 + $0x8] sm:$0xff]
    %v101 = vld [vmem:[#allocation7 + $0x10] sm:$0x77]
    %v102 = vld [vmem:[#allocation7 + $0x18] sm:$0x77]
    %v103 = vld [vmem:[%s3] sm:$0xf]
    %v105 = vlaneseq
    %v106 = vshrl.u32 %v105, 7
    %v107 = vsub.s32 0, %v106
    %v108 = vrot.slane %v103, %v107
    %v109 = vlaneseq
    %v110 = vshrl.u32 %v109, 7
    %v111 = vsub.s32 1, %v110
    %v112 = vrot.slane %v103, %v111
    %v113 = vlaneseq
    %v114 = vshrl.u32 %v113, 7
    %v115 = vsub.s32 2, %v114
    %v116 = vrot.slane %v103, %v115
    %v117 = vlaneseq
    %v118 = vshrl.u32 %v117, 7
    %v119 = vsub.s32 3, %v118
    %v120 = vrot.slane %v103, %v119
    %v129 = vunpack.c.l.b16 %v99
    %v130 = vunpack.c.h.b16 %v99
    %v131 = vunpack.c.l.b16 %v100
    %v132 = vunpack.c.h.b16 %v100
    %v133 = vunpack.c.l.b16 %v101
    %v134 = vunpack.c.h.b16 %v101
    %v135 = vunpack.c.l.b16 %v102
    %v136 = vunpack.c.h.b16 %v102
    %v137 = vpack.c.b16 %v133, %v129
    %v138 = vpack.c.b16 %v134, %v130
    %v139 = vpack.c.b16 %v135, %v131
    %v140 = vpack.c.b16 %v136, %v132
    %vm141 = vcmask 113664
    %v143 = vsel %vm141, %v98, 0
    %vm145 = vcmask 1046528
    %v147 = vsel %vm145, %v137, 0
    %v150 = vsel %vm145, %v138, 0
    %v153 = vsel %vm145, %v139, 0
    %v156 = vsel %vm145, %v140, 0
    %158 = vmatprep.subr.bf16.mxu0 %v150
    %159 = vmatpush1.bf16.msra.mxu0 %v147
    %160 = vmatprep.subr.bf16.mxu0 0
    %161 = vmatpush1.bf16.msra.mxu0 0
    %162 = vmatprep.subr.bf16.mxu0 0
    %163 = vmatpush1.bf16.msra.mxu0 0
    %164 = vmatprep.subr.bf16.mxu0 0
    %165 = vmatpush1.bf16.msra.mxu0 0
    %166 = vmatprep.subr.bf16.mxu0 0
    %167 = vmatpush1.bf16.msra.mxu0 0
    %168 = vmatprep.subr.bf16.mxu0 0
    %169 = vmatpush1.bf16.msra.mxu0 0
    %170 = vmatprep.subr.bf16.mxu0 0
    %171 = vmatpush1.bf16.msra.mxu0 0
    %172 = vmatprep.subr.bf16.mxu0 0
    %173 = vmatpush1.bf16.msra.mxu0 0
    %174 = vmatprep.subr.bf16.mxu0 0
    %175 = vmatpush1.bf16.msra.mxu0 0
    %176 = vmatprep.subr.bf16.mxu0 0
    %177 = vmatpush1.bf16.msra.mxu0 0
    %178 = vmatprep.subr.bf16.mxu0 0
    %179 = vmatpush1.bf16.msra.mxu0 0
    %180 = vmatprep.subr.bf16.mxu0 0
    %181 = vmatpush1.bf16.msra.mxu0 0
    %182 = vmatprep.subr.bf16.mxu0 0
    %183 = vmatpush1.bf16.msra.mxu0 0
    %184 = vmatprep.subr.bf16.mxu0 0
    %185 = vmatpush1.bf16.msra.mxu0 0
    %186 = vmatprep.subr.bf16.mxu0 0
    %187 = vmatpush1.bf16.msra.mxu0 0
    %188 = vmatprep.subr.bf16.mxu0 0
    %189 = vmatpush1.bf16.msra.mxu0 0
    %190 = vmatprep.mubr.bf16.mxu0 0
    %191 = vmatmul.mubr.bf16.gmra.mrb[0].mxu0 %v143
    %v192 = vpop.f32.mrb[0].mxu0
    %v193 = vadd.f32 %v108, %v192
    %v194 = vpop.f32.mrb[0].mxu0
    %v195 = vadd.f32 %v112, %v194
    %v196 = vpop.f32.mrb[0].mxu0
    %v197 = vpop.f32.mrb[0].mxu0
    %198 = vdwg.mxu0
    %199 = vmatprep.subr.bf16.mxu0 %v156
    %200 = vmatpush1.bf16.msra.mxu0 %v153
    %201 = vmatprep.subr.bf16.mxu0 0
    %202 = vmatpush1.bf16.msra.mxu0 0
    %203 = vmatprep.subr.bf16.mxu0 0
    %204 = vmatpush1.bf16.msra.mxu0 0
    %205 = vmatprep.subr.bf16.mxu0 0
    %206 = vmatpush1.bf16.msra.mxu0 0
    %207 = vmatprep.subr.bf16.mxu0 0
    %208 = vmatpush1.bf16.msra.mxu0 0
    %209 = vmatprep.subr.bf16.mxu0 0
    %210 = vmatpush1.bf16.msra.mxu0 0
    %211 = vmatprep.subr.bf16.mxu0 0
    %212 = vmatpush1.bf16.msra.mxu0 0
    %213 = vmatprep.subr.bf16.mxu0 0
    %214 = vmatpush1.bf16.msra.mxu0 0
    %215 = vmatprep.subr.bf16.mxu0 0
    %216 = vmatpush1.bf16.msra.mxu0 0
    %217 = vmatprep.subr.bf16.mxu0 0
    %218 = vmatpush1.bf16.msra.mxu0 0
    %219 = vmatprep.subr.bf16.mxu0 0
    %220 = vmatpush1.bf16.msra.mxu0 0
    %221 = vmatprep.subr.bf16.mxu0 0
    %222 = vmatpush1.bf16.msra.mxu0 0
    %223 = vmatprep.subr.bf16.mxu0 0
    %224 = vmatpush1.bf16.msra.mxu0 0
    %225 = vmatprep.subr.bf16.mxu0 0
    %226 = vmatpush1.bf16.msra.mxu0 0
    %227 = vmatprep.subr.bf16.mxu0 0
    %228 = vmatpush1.bf16.msra.mxu0 0
    %229 = vmatprep.subr.bf16.mxu0 0
    %230 = vmatpush1.bf16.msra.mxu0 0
    %231 = vmatprep.mubr.bf16.mxu0 0
    %232 = vmatmul.mubr.bf16.gmra.mrb[0].mxu0 %v143
    %v233 = vpop.f32.mrb[0].mxu0
    %v234 = vadd.f32 %v116, %v233
    %v235 = vpop.f32.mrb[0].mxu0
    %v236 = vadd.f32 %v120, %v235
    %v237 = vpop.f32.mrb[0].mxu0
    %v238 = vpop.f32.mrb[0].mxu0
    %239 = vdwg.mxu0
    %v240 = vmax.f32 %v193, 0.0
    %v241 = vmax.f32 %v195, 0.0
    %v242 = vmax.f32 %v234, 0.0
    %v243 = vmax.f32 %v236, 0.0
    %v244 = vpack.c.bf16 %v240, %v240
    %v245 = vpack.c.bf16 %v241, %v241
    %v246 = vpack.c.bf16 %v242, %v242
    %v247 = vpack.c.bf16 %v243, %v243
    %v248 = vld [vmem:[#allocation9] sm:$0xff]
    %v249 = vld [vmem:[#allocation9 + $0x8] sm:$0xff]
    %v250 = vld [vmem:[#allocation9 + $0x10] sm:$0xff]
    %v251 = vld [vmem:[#allocation9 + $0x18] sm:$0xff]
    %v252 = vld [vmem:[#allocation9 + $0x20] sm:$0xff]
    %v253 = vld [vmem:[#allocation9 + $0x28] sm:$0xff]
    %v254 = vld [vmem:[#allocation9 + $0x30] sm:$0xff]
    %v255 = vld [vmem:[#allocation9 + $0x38] sm:$0xff]
    %v256 = vld [vmem:[#allocation9 + $0x40] sm:$0xff]
    %v257 = vld [vmem:[#allocation9 + $0x48] sm:$0xff]
    %v258 = vld [vmem:[#allocation9 + $0x50] sm:$0xff]
    %v259 = vld [vmem:[#allocation9 + $0x58] sm:$0xff]
    %v260 = vld [vmem:[#allocation9 + $0x60] sm:$0xff]
    %v261 = vld [vmem:[#allocation9 + $0x68] sm:$0xff]
    %v262 = vld [vmem:[#allocation9 + $0x70] sm:$0xff]
    %v263 = vld [vmem:[#allocation9 + $0x78] sm:$0xff]
    %v264 = vld [vmem:[#allocation9 + $0x80] sm:$0xff]
    %v265 = vld [vmem:[#allocation9 + $0x88] sm:$0xff]
    %v266 = vld [vmem:[#allocation9 + $0x90] sm:$0xff]
    %v267 = vld [vmem:[#allocation9 + $0x98] sm:$0xff]
    %v268 = vld [vmem:[#allocation9 + $0xa0] sm:$0xff]
    %v269 = vld [vmem:[#allocation9 + $0xa8] sm:$0xff]
    %v270 = vld [vmem:[#allocation9 + $0xb0] sm:$0xff]
    %v271 = vld [vmem:[#allocation9 + $0xb8] sm:$0xff]
    %v272 = vld [vmem:[#allocation9 + $0xc0] sm:$0xff]
    %v273 = vld [vmem:[#allocation9 + $0xc8] sm:$0xff]
    %v274 = vld [vmem:[#allocation9 + $0xd0] sm:$0xff]
    %v275 = vld [vmem:[#allocation9 + $0xd8] sm:$0xff]
    %v276 = vld [vmem:[#allocation9 + $0xe0] sm:$0xff]
    %v277 = vld [vmem:[#allocation9 + $0xe8] sm:$0xff]
    %v278 = vld [vmem:[#allocation9 + $0xf0] sm:$0xff]
    %v279 = vld [vmem:[#allocation9 + $0xf8] sm:$0xff]
    %v280 = vld [vmem:[#allocation9 + $0x100] sm:$0xff]
    %v281 = vld [vmem:[#allocation9 + $0x108] sm:$0xff]
    %v282 = vld [vmem:[#allocation9 + $0x110] sm:$0xff]
    %v283 = vld [vmem:[#allocation9 + $0x118] sm:$0xff]
    %v284 = vld [vmem:[#allocation9 + $0x120] sm:$0xff]
    %v285 = vld [vmem:[#allocation9 + $0x128] sm:$0xff]
    %v286 = vld [vmem:[#allocation9 + $0x130] sm:$0xff]
    %v287 = vld [vmem:[#allocation9 + $0x138] sm:$0xff]
    %v288 = vld [vmem:[#allocation9 + $0x140] sm:$0xff]
    %v289 = vld [vmem:[#allocation9 + $0x148] sm:$0xff]
    %v290 = vld [vmem:[#allocation9 + $0x150] sm:$0xff]
    %v291 = vld [vmem:[#allocation9 + $0x158] sm:$0xff]
    %v292 = vld [vmem:[#allocation9 + $0x160] sm:$0xff]
    %v293 = vld [vmem:[#allocation9 + $0x168] sm:$0xff]
    %v294 = vld [vmem:[#allocation9 + $0x170] sm:$0xff]
    %v295 = vld [vmem:[#allocation9 + $0x178] sm:$0xff]
    %v296 = vld [vmem:[#allocation9 + $0x180] sm:$0xff]
    %v297 = vld [vmem:[#allocation9 + $0x188] sm:$0xff]
    %v298 = vld [vmem:[#allocation9 + $0x190] sm:$0xff]
    %v299 = vld [vmem:[#allocation9 + $0x198] sm:$0xff]
    %v300 = vld [vmem:[#allocation9 + $0x1a0] sm:$0xff]
    %v301 = vld [vmem:[#allocation9 + $0x1a8] sm:$0xff]
    %v302 = vld [vmem:[#allocation9 + $0x1b0] sm:$0xff]
    %v303 = vld [vmem:[#allocation9 + $0x1b8] sm:$0xff]
    %v304 = vld [vmem:[#allocation9 + $0x1c0] sm:$0xff]
    %v305 = vld [vmem:[#allocation9 + $0x1c8] sm:$0xff]
    %v306 = vld [vmem:[#allocation9 + $0x1d0] sm:$0xff]
    %v307 = vld [vmem:[#allocation9 + $0x1d8] sm:$0xff]
    %v308 = vld [vmem:[#allocation9 + $0x1e0] sm:$0xff]
    %v309 = vld [vmem:[#allocation9 + $0x1e8] sm:$0xff]
    %v310 = vld [vmem:[#allocation9 + $0x1f0] sm:$0xff]
    %v311 = vld [vmem:[#allocation9 + $0x1f8] sm:$0xff]
    %v312 = vld [vmem:[#allocation9 + $0x200] sm:$0xff]
    %v313 = vld [vmem:[#allocation9 + $0x208] sm:$0xff]
    %v314 = vld [vmem:[#allocation9 + $0x210] sm:$0xff]
    %v315 = vld [vmem:[#allocation9 + $0x218] sm:$0xff]
    %v316 = vld [vmem:[#allocation9 + $0x220] sm:$0xff]
    %v317 = vld [vmem:[#allocation9 + $0x228] sm:$0xff]
    %v318 = vld [vmem:[#allocation9 + $0x230] sm:$0xff]
    %v319 = vld [vmem:[#allocation9 + $0x238] sm:$0xff]
    %v320 = vld [vmem:[#allocation9 + $0x240] sm:$0xff]
    %v321 = vld [vmem:[#allocation9 + $0x248] sm:$0xff]
    %v322 = vld [vmem:[#allocation9 + $0x250] sm:$0xff]
    %v323 = vld [vmem:[#allocation9 + $0x258] sm:$0xff]
    %v324 = vld [vmem:[#allocation9 + $0x260] sm:$0xff]
    %v325 = vld [vmem:[#allocation9 + $0x268] sm:$0xff]
    %v326 = vld [vmem:[#allocation9 + $0x270] sm:$0xff]
    %v327 = vld [vmem:[#allocation9 + $0x278] sm:$0xff]
    %v328 = vld [vmem:[#allocation9 + $0x280] sm:$0xff]
    %v329 = vld [vmem:[#allocation9 + $0x288] sm:$0xff]
    %v330 = vld [vmem:[#allocation9 + $0x290] sm:$0xff]
    %v331 = vld [vmem:[#allocation9 + $0x298] sm:$0xff]
    %v332 = vld [vmem:[#allocation9 + $0x2a0] sm:$0xff]
    %v333 = vld [vmem:[#allocation9 + $0x2a8] sm:$0xff]
    %v334 = vld [vmem:[#allocation9 + $0x2b0] sm:$0xff]
    %v335 = vld [vmem:[#allocation9 + $0x2b8] sm:$0xff]
    %v336 = vld [vmem:[#allocation9 + $0x2c0] sm:$0xff]
    %v337 = vld [vmem:[#allocation9 + $0x2c8] sm:$0xff]
    %v338 = vld [vmem:[#allocation9 + $0x2d0] sm:$0xff]
    %v339 = vld [vmem:[#allocation9 + $0x2d8] sm:$0xff]
    %v340 = vld [vmem:[#allocation9 + $0x2e0] sm:$0xff]
    %v341 = vld [vmem:[#allocation9 + $0x2e8] sm:$0xff]
    %v342 = vld [vmem:[#allocation9 + $0x2f0] sm:$0xff]
    %v343 = vld [vmem:[#allocation9 + $0x2f8] sm:$0xff]
    %v344 = vld [vmem:[#allocation9 + $0x300] sm:$0xff]
    %v345 = vld [vmem:[#allocation9 + $0x308] sm:$0xff]
    %v346 = vld [vmem:[#allocation9 + $0x310] sm:$0xff]
    %v347 = vld [vmem:[#allocation9 + $0x318] sm:$0xff]
    %v348 = vld [vmem:[#allocation9 + $0x320] sm:$0xff]
    %v349 = vld [vmem:[#allocation9 + $0x328] sm:$0xff]
    %v350 = vld [vmem:[#allocation9 + $0x330] sm:$0xff]
    %v351 = vld [vmem:[#allocation9 + $0x338] sm:$0xff]
    %v352 = vld [vmem:[#allocation9 + $0x340] sm:$0xff]
    %v353 = vld [vmem:[#allocation9 + $0x348] sm:$0xff]
    %v354 = vld [vmem:[#allocation9 + $0x350] sm:$0xff]
    %v355 = vld [vmem:[#allocation9 + $0x358] sm:$0xff]
    %v356 = vld [vmem:[#allocation9 + $0x360] sm:$0xff]
    %v357 = vld [vmem:[#allocation9 + $0x368] sm:$0xff]
    %v358 = vld [vmem:[#allocation9 + $0x370] sm:$0xff]
    %v359 = vld [vmem:[#allocation9 + $0x378] sm:$0xff]
    %v360 = vld [vmem:[#allocation9 + $0x380] sm:$0xff]
    %v361 = vld [vmem:[#allocation9 + $0x388] sm:$0xff]
    %v362 = vld [vmem:[#allocation9 + $0x390] sm:$0xff]
    %v363 = vld [vmem:[#allocation9 + $0x398] sm:$0xff]
    %v364 = vld [vmem:[#allocation9 + $0x3a0] sm:$0xff]
    %v365 = vld [vmem:[#allocation9 + $0x3a8] sm:$0xff]
    %v366 = vld [vmem:[#allocation9 + $0x3b0] sm:$0xff]
    %v367 = vld [vmem:[#allocation9 + $0x3b8] sm:$0xff]
    %v368 = vld [vmem:[#allocation9 + $0x3c0] sm:$0xff]
    %v369 = vld [vmem:[#allocation9 + $0x3c8] sm:$0xff]
    %v370 = vld [vmem:[#allocation9 + $0x3d0] sm:$0xff]
    %v371 = vld [vmem:[#allocation9 + $0x3d8] sm:$0xff]
    %v372 = vld [vmem:[#allocation9 + $0x3e0] sm:$0xff]
    %v373 = vld [vmem:[#allocation9 + $0x3e8] sm:$0xff]
    %v374 = vld [vmem:[#allocation9 + $0x3f0] sm:$0xff]
    %v375 = vld [vmem:[#allocation9 + $0x3f8] sm:$0xff]
    %v376 = vld [vmem:[%s5] sm:$0xf]
    %v378 = vlaneseq
    %v379 = vshrl.u32 %v378, 7
    %v380 = vsub.s32 0, %v379
    %v381 = vrot.slane %v376, %v380
    %v382 = vlaneseq
    %v383 = vshrl.u32 %v382, 7
    %v384 = vsub.s32 1, %v383
    %v385 = vrot.slane %v376, %v384
    %v386 = vlaneseq
    %v387 = vshrl.u32 %v386, 7
    %v388 = vsub.s32 2, %v387
    %v389 = vrot.slane %v376, %v388
    %v390 = vlaneseq
    %v391 = vshrl.u32 %v390, 7
    %v392 = vsub.s32 3, %v391
    %v393 = vrot.slane %v376, %v392
    %v526 = vunpack.c.l.b16 %v248
    %v527 = vunpack.c.h.b16 %v248
    %v528 = vunpack.c.l.b16 %v249
    %v529 = vunpack.c.h.b16 %v249
    %v530 = vunpack.c.l.b16 %v250
    %v531 = vunpack.c.h.b16 %v250
    %v532 = vunpack.c.l.b16 %v251
    %v533 = vunpack.c.h.b16 %v251
    %v534 = vunpack.c.l.b16 %v252
    %v535 = vunpack.c.h.b16 %v252
    %v536 = vunpack.c.l.b16 %v253
    %v537 = vunpack.c.h.b16 %v253
    %v538 = vunpack.c.l.b16 %v254
    %v539 = vunpack.c.h.b16 %v254
    %v540 = vunpack.c.l.b16 %v255
    %v541 = vunpack.c.h.b16 %v255
    %v542 = vunpack.c.l.b16 %v256
    %v543 = vunpack.c.h.b16 %v256
    %v544 = vunpack.c.l.b16 %v257
    %v545 = vunpack.c.h.b16 %v257
    %v546 = vunpack.c.l.b16 %v258
    %v547 = vunpack.c.h.b16 %v258
    %v548 = vunpack.c.l.b16 %v259
    %v549 = vunpack.c.h.b16 %v259
    %v550 = vunpack.c.l.b16 %v260
    %v551 = vunpack.c.h.b16 %v260
    %v552 = vunpack.c.l.b16 %v261
    %v553 = vunpack.c.h.b16 %v261
    %v554 = vunpack.c.l.b16 %v262
    %v555 = vunpack.c.h.b16 %v262
    %v556 = vunpack.c.l.b16 %v263
    %v557 = vunpack.c.h.b16 %v263
    %v558 = vunpack.c.l.b16 %v264
    %v559 = vunpack.c.h.b16 %v264
    %v560 = vunpack.c.l.b16 %v265
    %v561 = vunpack.c.h.b16 %v265
    %v562 = vunpack.c.l.b16 %v266
    %v563 = vunpack.c.h.b16 %v266
    %v564 = vunpack.c.l.b16 %v267
    %v565 = vunpack.c.h.b16 %v267
    %v566 = vunpack.c.l.b16 %v268
    %v567 = vunpack.c.h.b16 %v268
    %v568 = vunpack.c.l.b16 %v269
    %v569 = vunpack.c.h.b16 %v269
    %v570 = vunpack.c.l.b16 %v270
    %v571 = vunpack.c.h.b16 %v270
    %v572 = vunpack.c.l.b16 %v271
    %v573 = vunpack.c.h.b16 %v271
    %v574 = vunpack.c.l.b16 %v272
    %v575 = vunpack.c.h.b16 %v272
    %v576 = vunpack.c.l.b16 %v273
    %v577 = vunpack.c.h.b16 %v273
    %v578 = vunpack.c.l.b16 %v274
    %v579 = vunpack.c.h.b16 %v274
    %v580 = vunpack.c.l.b16 %v275
    %v581 = vunpack.c.h.b16 %v275
    %v582 = vunpack.c.l.b16 %v276
    %v583 = vunpack.c.h.b16 %v276
    %v584 = vunpack.c.l.b16 %v277
    %v585 = vunpack.c.h.b16 %v277
    %v586 = vunpack.c.l.b16 %v278
    %v587 = vunpack.c.h.b16 %v278
    %v588 = vunpack.c.l.b16 %v279
    %v589 = vunpack.c.h.b16 %v279
    %v590 = vunpack.c.l.b16 %v280
    %v591 = vunpack.c.h.b16 %v280
    %v592 = vunpack.c.l.b16 %v281
    %v593 = vunpack.c.h.b16 %v281
    %v594 = vunpack.c.l.b16 %v282
    %v595 = vunpack.c.h.b16 %v282
    %v596 = vunpack.c.l.b16 %v283
    %v597 = vunpack.c.h.b16 %v283
    %v598 = vunpack.c.l.b16 %v284
    %v599 = vunpack.c.h.b16 %v284
    %v600 = vunpack.c.l.b16 %v285
    %v601 = vunpack.c.h.b16 %v285
    %v602 = vunpack.c.l.b16 %v286
    %v603 = vunpack.c.h.b16 %v286
    %v604 = vunpack.c.l.b16 %v287
    %v605 = vunpack.c.h.b16 %v287
    %v606 = vunpack.c.l.b16 %v288
    %v607 = vunpack.c.h.b16 %v288
    %v608 = vunpack.c.l.b16 %v289
    %v609 = vunpack.c.h.b16 %v289
    %v610 = vunpack.c.l.b16 %v290
    %v611 = vunpack.c.h.b16 %v290
    %v612 = vunpack.c.l.b16 %v291
    %v613 = vunpack.c.h.b16 %v291
    %v614 = vunpack.c.l.b16 %v292
    %v615 = vunpack.c.h.b16 %v292
    %v616 = vunpack.c.l.b16 %v293
    %v617 = vunpack.c.h.b16 %v293
    %v618 = vunpack.c.l.b16 %v294
    %v619 = vunpack.c.h.b16 %v294
    %v620 = vunpack.c.l.b16 %v295
    %v621 = vunpack.c.h.b16 %v295
    %v622 = vunpack.c.l.b16 %v296
    %v623 = vunpack.c.h.b16 %v296
    %v624 = vunpack.c.l.b16 %v297
    %v625 = vunpack.c.h.b16 %v297
    %v626 = vunpack.c.l.b16 %v298
    %v627 = vunpack.c.h.b16 %v298
    %v628 = vunpack.c.l.b16 %v299
    %v629 = vunpack.c.h.b16 %v299
    %v630 = vunpack.c.l.b16 %v300
    %v631 = vunpack.c.h.b16 %v300
    %v632 = vunpack.c.l.b16 %v301
    %v633 = vunpack.c.h.b16 %v301
    %v634 = vunpack.c.l.b16 %v302
    %v635 = vunpack.c.h.b16 %v302
    %v636 = vunpack.c.l.b16 %v303
    %v637 = vunpack.c.h.b16 %v303
    %v638 = vunpack.c.l.b16 %v304
    %v639 = vunpack.c.h.b16 %v304
    %v640 = vunpack.c.l.b16 %v305
    %v641 = vunpack.c.h.b16 %v305
    %v642 = vunpack.c.l.b16 %v306
    %v643 = vunpack.c.h.b16 %v306
    %v644 = vunpack.c.l.b16 %v307
    %v645 = vunpack.c.h.b16 %v307
    %v646 = vunpack.c.l.b16 %v308
    %v647 = vunpack.c.h.b16 %v308
    %v648 = vunpack.c.l.b16 %v309
    %v649 = vunpack.c.h.b16 %v309
    %v650 = vunpack.c.l.b16 %v310
    %v651 = vunpack.c.h.b16 %v310
    %v652 = vunpack.c.l.b16 %v311
    %v653 = vunpack.c.h.b16 %v311
    %v654 = vunpack.c.l.b16 %v312
    %v655 = vunpack.c.h.b16 %v312
    %v656 = vunpack.c.l.b16 %v313
    %v657 = vunpack.c.h.b16 %v313
    %v658 = vunpack.c.l.b16 %v314
    %v659 = vunpack.c.h.b16 %v314
    %v660 = vunpack.c.l.b16 %v315
    %v661 = vunpack.c.h.b16 %v315
    %v662 = vunpack.c.l.b16 %v316
    %v663 = vunpack.c.h.b16 %v316
    %v664 = vunpack.c.l.b16 %v317
    %v665 = vunpack.c.h.b16 %v317
    %v666 = vunpack.c.l.b16 %v318
    %v667 = vunpack.c.h.b16 %v318
    %v668 = vunpack.c.l.b16 %v319
    %v669 = vunpack.c.h.b16 %v319
    %v670 = vunpack.c.l.b16 %v320
    %v671 = vunpack.c.h.b16 %v320
    %v672 = vunpack.c.l.b16 %v321
    %v673 = vunpack.c.h.b16 %v321
    %v674 = vunpack.c.l.b16 %v322
    %v675 = vunpack.c.h.b16 %v322
    %v676 = vunpack.c.l.b16 %v323
    %v677 = vunpack.c.h.b16 %v323
    %v678 = vunpack.c.l.b16 %v324
    %v679 = vunpack.c.h.b16 %v324
    %v680 = vunpack.c.l.b16 %v325
    %v681 = vunpack.c.h.b16 %v325
    %v682 = vunpack.c.l.b16 %v326
    %v683 = vunpack.c.h.b16 %v326
    %v684 = vunpack.c.l.b16 %v327
    %v685 = vunpack.c.h.b16 %v327
    %v686 = vunpack.c.l.b16 %v328
    %v687 = vunpack.c.h.b16 %v328
    %v688 = vunpack.c.l.b16 %v329
    %v689 = vunpack.c.h.b16 %v329
    %v690 = vunpack.c.l.b16 %v330
    %v691 = vunpack.c.h.b16 %v330
    %v692 = vunpack.c.l.b16 %v331
    %v693 = vunpack.c.h.b16 %v331
    %v694 = vunpack.c.l.b16 %v332
    %v695 = vunpack.c.h.b16 %v332
    %v696 = vunpack.c.l.b16 %v333
    %v697 = vunpack.c.h.b16 %v333
    %v698 = vunpack.c.l.b16 %v334
    %v699 = vunpack.c.h.b16 %v334
    %v700 = vunpack.c.l.b16 %v335
    %v701 = vunpack.c.h.b16 %v335
    %v702 = vunpack.c.l.b16 %v336
    %v703 = vunpack.c.h.b16 %v336
    %v704 = vunpack.c.l.b16 %v337
    %v705 = vunpack.c.h.b16 %v337
    %v706 = vunpack.c.l.b16 %v338
    %v707 = vunpack.c.h.b16 %v338
    %v708 = vunpack.c.l.b16 %v339
    %v709 = vunpack.c.h.b16 %v339
    %v710 = vunpack.c.l.b16 %v340
    %v711 = vunpack.c.h.b16 %v340
    %v712 = vunpack.c.l.b16 %v341
    %v713 = vunpack.c.h.b16 %v341
    %v714 = vunpack.c.l.b16 %v342
    %v715 = vunpack.c.h.b16 %v342
    %v716 = vunpack.c.l.b16 %v343
    %v717 = vunpack.c.h.b16 %v343
    %v718 = vunpack.c.l.b16 %v344
    %v719 = vunpack.c.h.b16 %v344
    %v720 = vunpack.c.l.b16 %v345
    %v721 = vunpack.c.h.b16 %v345
    %v722 = vunpack.c.l.b16 %v346
    %v723 = vunpack.c.h.b16 %v346
    %v724 = vunpack.c.l.b16 %v347
    %v725 = vunpack.c.h.b16 %v347
    %v726 = vunpack.c.l.b16 %v348
    %v727 = vunpack.c.h.b16 %v348
    %v728 = vunpack.c.l.b16 %v349
    %v729 = vunpack.c.h.b16 %v349
    %v730 = vunpack.c.l.b16 %v350
    %v731 = vunpack.c.h.b16 %v350
    %v732 = vunpack.c.l.b16 %v351
    %v733 = vunpack.c.h.b16 %v351
    %v734 = vunpack.c.l.b16 %v352
    %v735 = vunpack.c.h.b16 %v352
    %v736 = vunpack.c.l.b16 %v353
    %v737 = vunpack.c.h.b16 %v353
    %v738 = vunpack.c.l.b16 %v354
    %v739 = vunpack.c.h.b16 %v354
    %v740 = vunpack.c.l.b16 %v355
    %v741 = vunpack.c.h.b16 %v355
    %v742 = vunpack.c.l.b16 %v356
    %v743 = vunpack.c.h.b16 %v356
    %v744 = vunpack.c.l.b16 %v357
    %v745 = vunpack.c.h.b16 %v357
    %v746 = vunpack.c.l.b16 %v358
    %v747 = vunpack.c.h.b16 %v358
    %v748 = vunpack.c.l.b16 %v359
    %v749 = vunpack.c.h.b16 %v359
    %v750 = vunpack.c.l.b16 %v360
    %v751 = vunpack.c.h.b16 %v360
    %v752 = vunpack.c.l.b16 %v361
    %v753 = vunpack.c.h.b16 %v361
    %v754 = vunpack.c.l.b16 %v362
    %v755 = vunpack.c.h.b16 %v362
    %v756 = vunpack.c.l.b16 %v363
    %v757 = vunpack.c.h.b16 %v363
    %v758 = vunpack.c.l.b16 %v364
    %v759 = vunpack.c.h.b16 %v364
    %v760 = vunpack.c.l.b16 %v365
    %v761 = vunpack.c.h.b16 %v365
    %v762 = vunpack.c.l.b16 %v366
    %v763 = vunpack.c.h.b16 %v366
    %v764 = vunpack.c.l.b16 %v367
    %v765 = vunpack.c.h.b16 %v367
    %v766 = vunpack.c.l.b16 %v368
    %v767 = vunpack.c.h.b16 %v368
    %v768 = vunpack.c.l.b16 %v369
    %v769 = vunpack.c.h.b16 %v369
    %v770 = vunpack.c.l.b16 %v370
    %v771 = vunpack.c.h.b16 %v370
    %v772 = vunpack.c.l.b16 %v371
    %v773 = vunpack.c.h.b16 %v371
    %v774 = vunpack.c.l.b16 %v372
    %v775 = vunpack.c.h.b16 %v372
    %v776 = vunpack.c.l.b16 %v373
    %v777 = vunpack.c.h.b16 %v373
    %v778 = vunpack.c.l.b16 %v374
    %v779 = vunpack.c.h.b16 %v374
    %v780 = vunpack.c.l.b16 %v375
    %v781 = vunpack.c.h.b16 %v375
    %v782 = vpack.c.b16 %v530, %v526
    %v783 = vpack.c.b16 %v531, %v527
    %v784 = vpack.c.b16 %v532, %v528
    %v785 = vpack.c.b16 %v533, %v529
    %v786 = vpack.c.b16 %v538, %v534
    %v787 = vpack.c.b16 %v539, %v535
    %v788 = vpack.c.b16 %v540, %v536
    %v789 = vpack.c.b16 %v541, %v537
    %v790 = vpack.c.b16 %v546, %v542
    %v791 = vpack.c.b16 %v547, %v543
    %v792 = vpack.c.b16 %v548, %v544
    %v793 = vpack.c.b16 %v549, %v545
    %v794 = vpack.c.b16 %v554, %v550
    %v795 = vpack.c.b16 %v555, %v551
    %v796 = vpack.c.b16 %v556, %v552
    %v797 = vpack.c.b16 %v557, %v553
    %v798 = vpack.c.b16 %v562, %v558
    %v799 = vpack.c.b16 %v563, %v559
    %v800 = vpack.c.b16 %v564, %v560
    %v801 = vpack.c.b16 %v565, %v561
    %v802 = vpack.c.b16 %v570, %v566
    %v803 = vpack.c.b16 %v571, %v567
    %v804 = vpack.c.b16 %v572, %v568
    %v805 = vpack.c.b16 %v573, %v569
    %v806 = vpack.c.b16 %v578, %v574
    %v807 = vpack.c.b16 %v579, %v575
    %v808 = vpack.c.b16 %v580, %v576
    %v809 = vpack.c.b16 %v581, %v577
    %v810 = vpack.c.b16 %v586, %v582
    %v811 = vpack.c.b16 %v587, %v583
    %v812 = vpack.c.b16 %v588, %v584
    %v813 = vpack.c.b16 %v589, %v585
    %v814 = vpack.c.b16 %v594, %v590
    %v815 = vpack.c.b16 %v595, %v591
    %v816 = vpack.c.b16 %v596, %v592
    %v817 = vpack.c.b16 %v597, %v593
    %v818 = vpack.c.b16 %v602, %v598
    %v819 = vpack.c.b16 %v603, %v599
    %v820 = vpack.c.b16 %v604, %v600
    %v821 = vpack.c.b16 %v605, %v601
    %v822 = vpack.c.b16 %v610, %v606
    %v823 = vpack.c.b16 %v611, %v607
    %v824 = vpack.c.b16 %v612, %v608
    %v825 = vpack.c.b16 %v613, %v609
    %v826 = vpack.c.b16 %v618, %v614
    %v827 = vpack.c.b16 %v619, %v615
    %v828 = vpack.c.b16 %v620, %v616
    %v829 = vpack.c.b16 %v621, %v617
    %v830 = vpack.c.b16 %v626, %v622
    %v831 = vpack.c.b16 %v627, %v623
    %v832 = vpack.c.b16 %v628, %v624
    %v833 = vpack.c.b16 %v629, %v625
    %v834 = vpack.c.b16 %v634, %v630
    %v835 = vpack.c.b16 %v635, %v631
    %v836 = vpack.c.b16 %v636, %v632
    %v837 = vpack.c.b16 %v637, %v633
    %v838 = vpack.c.b16 %v642, %v638
    %v839 = vpack.c.b16 %v643, %v639
    %v840 = vpack.c.b16 %v644, %v640
    %v841 = vpack.c.b16 %v645, %v641
    %v842 = vpack.c.b16 %v650, %v646
    %v843 = vpack.c.b16 %v651, %v647
    %v844 = vpack.c.b16 %v652, %v648
    %v845 = vpack.c.b16 %v653, %v649
    %v846 = vpack.c.b16 %v658, %v654
    %v847 = vpack.c.b16 %v659, %v655
    %v848 = vpack.c.b16 %v660, %v656
    %v849 = vpack.c.b16 %v661, %v657
    %v850 = vpack.c.b16 %v666, %v662
    %v851 = vpack.c.b16 %v667, %v663
    %v852 = vpack.c.b16 %v668, %v664
    %v853 = vpack.c.b16 %v669, %v665
    %v854 = vpack.c.b16 %v674, %v670
    %v855 = vpack.c.b16 %v675, %v671
    %v856 = vpack.c.b16 %v676, %v672
    %v857 = vpack.c.b16 %v677, %v673
    %v858 = vpack.c.b16 %v682, %v678
    %v859 = vpack.c.b16 %v683, %v679
    %v860 = vpack.c.b16 %v684, %v680
    %v861 = vpack.c.b16 %v685, %v681
    %v862 = vpack.c.b16 %v690, %v686
    %v863 = vpack.c.b16 %v691, %v687
    %v864 = vpack.c.b16 %v692, %v688
    %v865 = vpack.c.b16 %v693, %v689
    %v866 = vpack.c.b16 %v698, %v694
    %v867 = vpack.c.b16 %v699, %v695
    %v868 = vpack.c.b16 %v700, %v696
    %v869 = vpack.c.b16 %v701, %v697
    %v870 = vpack.c.b16 %v706, %v702
    %v871 = vpack.c.b16 %v707, %v703
    %v872 = vpack.c.b16 %v708, %v704
    %v873 = vpack.c.b16 %v709, %v705
    %v874 = vpack.c.b16 %v714, %v710
    %v875 = vpack.c.b16 %v715, %v711
    %v876 = vpack.c.b16 %v716, %v712
    %v877 = vpack.c.b16 %v717, %v713
    %v878 = vpack.c.b16 %v722, %v718
    %v879 = vpack.c.b16 %v723, %v719
    %v880 = vpack.c.b16 %v724, %v720
    %v881 = vpack.c.b16 %v725, %v721
    %v882 = vpack.c.b16 %v730, %v726
    %v883 = vpack.c.b16 %v731, %v727
    %v884 = vpack.c.b16 %v732, %v728
    %v885 = vpack.c.b16 %v733, %v729
    %v886 = vpack.c.b16 %v738, %v734
    %v887 = vpack.c.b16 %v739, %v735
    %v888 = vpack.c.b16 %v740, %v736
    %v889 = vpack.c.b16 %v741, %v737
    %v890 = vpack.c.b16 %v746, %v742
    %v891 = vpack.c.b16 %v747, %v743
    %v892 = vpack.c.b16 %v748, %v744
    %v893 = vpack.c.b16 %v749, %v745
    %v894 = vpack.c.b16 %v754, %v750
    %v895 = vpack.c.b16 %v755, %v751
    %v896 = vpack.c.b16 %v756, %v752
    %v897 = vpack.c.b16 %v757, %v753
    %v898 = vpack.c.b16 %v762, %v758
    %v899 = vpack.c.b16 %v763, %v759
    %v900 = vpack.c.b16 %v764, %v760
    %v901 = vpack.c.b16 %v765, %v761
    %v902 = vpack.c.b16 %v770, %v766
    %v903 = vpack.c.b16 %v771, %v767
    %v904 = vpack.c.b16 %v772, %v768
    %v905 = vpack.c.b16 %v773, %v769
    %v906 = vpack.c.b16 %v778, %v774
    %v907 = vpack.c.b16 %v779, %v775
    %v908 = vpack.c.b16 %v780, %v776
    %v909 = vpack.c.b16 %v781, %v777
    %1038 = vmatprep.subr.bf16.mxu0 %v783
    %1039 = vmatpush1.bf16.msra.mxu0 %v782
    %1040 = vmatprep.subr.bf16.mxu0 %v787
    %1041 = vmatpush1.bf16.msra.mxu0 %v786
    %1042 = vmatprep.subr.bf16.mxu0 %v791
    %1043 = vmatpush1.bf16.msra.mxu0 %v790
    %1044 = vmatprep.subr.bf16.mxu0 %v795
    %1045 = vmatpush1.bf16.msra.mxu0 %v794
    %1046 = vmatprep.subr.bf16.mxu0 %v799
    %1047 = vmatpush1.bf16.msra.mxu0 %v798
    %1048 = vmatprep.subr.bf16.mxu0 %v803
    %1049 = vmatpush1.bf16.msra.mxu0 %v802
    %1050 = vmatprep.subr.bf16.mxu0 %v807
    %1051 = vmatpush1.bf16.msra.mxu0 %v806
    %1052 = vmatprep.subr.bf16.mxu0 %v811
    %1053 = vmatpush1.bf16.msra.mxu0 %v810
    %1054 = vmatprep.subr.bf16.mxu0 %v815
    %1055 = vmatpush1.bf16.msra.mxu0 %v814
    %1056 = vmatprep.subr.bf16.mxu0 %v819
    %1057 = vmatpush1.bf16.msra.mxu0 %v818
    %1058 = vmatprep.subr.bf16.mxu0 %v823
    %1059 = vmatpush1.bf16.msra.mxu0 %v822
    %1060 = vmatprep.subr.bf16.mxu0 %v827
    %1061 = vmatpush1.bf16.msra.mxu0 %v826
    %1062 = vmatprep.subr.bf16.mxu0 %v831
    %1063 = vmatpush1.bf16.msra.mxu0 %v830
    %1064 = vmatprep.subr.bf16.mxu0 %v835
    %1065 = vmatpush1.bf16.msra.mxu0 %v834
    %1066 = vmatprep.subr.bf16.mxu0 %v839
    %1067 = vmatpush1.bf16.msra.mxu0 %v838
    %1068 = vmatprep.subr.bf16.mxu0 %v843
    %1069 = vmatpush1.bf16.msra.mxu0 %v842
    %1070 = vmatprep.mubr.bf16.mxu0 %v245
    %1071 = vmatmul.mubr.bf16.gmra.mrb[0].mxu0 %v244
    %v1072 = vpop.f32.mrb[0].mxu0
    %v1073 = vadd.f32 %v381, %v1072
    %v1074 = vpop.f32.mrb[0].mxu0
    %v1075 = vadd.f32 %v385, %v1074
    %v1076 = vpop.f32.mrb[0].mxu0
    %v1077 = vpop.f32.mrb[0].mxu0
    %1078 = vdwg.mxu0
    %1079 = vmatprep.subr.bf16.mxu0 %v847
    %1080 = vmatpush1.bf16.msra.mxu0 %v846
    %1081 = vmatprep.subr.bf16.mxu0 %v851
    %1082 = vmatpush1.bf16.msra.mxu0 %v850
    %1083 = vmatprep.subr.bf16.mxu0 %v855
    %1084 = vmatpush1.bf16.msra.mxu0 %v854
    %1085 = vmatprep.subr.bf16.mxu0 %v859
    %1086 = vmatpush1.bf16.msra.mxu0 %v858
    %1087 = vmatprep.subr.bf16.mxu0 %v863
    %1088 = vmatpush1.bf16.msra.mxu0 %v862
    %1089 = vmatprep.subr.bf16.mxu0 %v867
    %1090 = vmatpush1.bf16.msra.mxu0 %v866
    %1091 = vmatprep.subr.bf16.mxu0 %v871
    %1092 = vmatpush1.bf16.msra.mxu0 %v870
    %1093 = vmatprep.subr.bf16.mxu0 %v875
    %1094 = vmatpush1.bf16.msra.mxu0 %v874
    %1095 = vmatprep.subr.bf16.mxu0 %v879
    %1096 = vmatpush1.bf16.msra.mxu0 %v878
    %1097 = vmatprep.subr.bf16.mxu0 %v883
    %1098 = vmatpush1.bf16.msra.mxu0 %v882
    %1099 = vmatprep.subr.bf16.mxu0 %v887
    %1100 = vmatpush1.bf16.msra.mxu0 %v886
    %1101 = vmatprep.subr.bf16.mxu0 %v891
    %1102 = vmatpush1.bf16.msra.mxu0 %v890
    %1103 = vmatprep.subr.bf16.mxu0 %v895
    %1104 = vmatpush1.bf16.msra.mxu0 %v894
    %1105 = vmatprep.subr.bf16.mxu0 %v899
    %1106 = vmatpush1.bf16.msra.mxu0 %v898
    %1107 = vmatprep.subr.bf16.mxu0 %v903
    %1108 = vmatpush1.bf16.msra.mxu0 %v902
    %1109 = vmatprep.subr.bf16.mxu0 %v907
    %1110 = vmatpush1.bf16.msra.mxu0 %v906
    %1111 = vmatprep.mubr.bf16.mxu0 %v247
    %1112 = vmatmul.mubr.bf16.gmra.mrb[0].mxu0 %v246
    %v1113 = vpop.f32.mrb[0].mxu0
    %v1114 = vadd.f32 %v1073, %v1113
    %v1115 = vpop.f32.mrb[0].mxu0
    %v1116 = vadd.f32 %v1075, %v1115
    %v1117 = vpop.f32.mrb[0].mxu0
    %v1118 = vpop.f32.mrb[0].mxu0
    %1119 = vdwg.mxu0
    %1120 = vmatprep.subr.bf16.mxu0 %v785
    %1121 = vmatpush1.bf16.msra.mxu0 %v784
    %1122 = vmatprep.subr.bf16.mxu0 %v789
    %1123 = vmatpush1.bf16.msra.mxu0 %v788
    %1124 = vmatprep.subr.bf16.mxu0 %v793
    %1125 = vmatpush1.bf16.msra.mxu0 %v792
    %1126 = vmatprep.subr.bf16.mxu0 %v797
    %1127 = vmatpush1.bf16.msra.mxu0 %v796
    %1128 = vmatprep.subr.bf16.mxu0 %v801
    %1129 = vmatpush1.bf16.msra.mxu0 %v800
    %1130 = vmatprep.subr.bf16.mxu0 %v805
    %1131 = vmatpush1.bf16.msra.mxu0 %v804
    %1132 = vmatprep.subr.bf16.mxu0 %v809
    %1133 = vmatpush1.bf16.msra.mxu0 %v808
    %1134 = vmatprep.subr.bf16.mxu0 %v813
    %1135 = vmatpush1.bf16.msra.mxu0 %v812
    %1136 = vmatprep.subr.bf16.mxu0 %v817
    %1137 = vmatpush1.bf16.msra.mxu0 %v816
    %1138 = vmatprep.subr.bf16.mxu0 %v821
    %1139 = vmatpush1.bf16.msra.mxu0 %v820
    %1140 = vmatprep.subr.bf16.mxu0 %v825
    %1141 = vmatpush1.bf16.msra.mxu0 %v824
    %1142 = vmatprep.subr.bf16.mxu0 %v829
    %1143 = vmatpush1.bf16.msra.mxu0 %v828
    %1144 = vmatprep.subr.bf16.mxu0 %v833
    %1145 = vmatpush1.bf16.msra.mxu0 %v832
    %1146 = vmatprep.subr.bf16.mxu0 %v837
    %1147 = vmatpush1.bf16.msra.mxu0 %v836
    %1148 = vmatprep.subr.bf16.mxu0 %v841
    %1149 = vmatpush1.bf16.msra.mxu0 %v840
    %1150 = vmatprep.subr.bf16.mxu0 %v845
    %1151 = vmatpush1.bf16.msra.mxu0 %v844
    %1152 = vmatprep.mubr.bf16.mxu0 %v245
    %1153 = vmatmul.mubr.bf16.gmra.mrb[0].mxu0 %v244
    %v1154 = vpop.f32.mrb[0].mxu0
    %v1155 = vadd.f32 %v389, %v1154
    %v1156 = vpop.f32.mrb[0].mxu0
    %v1157 = vadd.f32 %v393, %v1156
    %v1158 = vpop.f32.mrb[0].mxu0
    %v1159 = vpop.f32.mrb[0].mxu0
    %1160 = vdwg.mxu0
    %1161 = vmatprep.subr.bf16.mxu0 %v849
    %1162 = vmatpush1.bf16.msra.mxu0 %v848
    %1163 = vmatprep.subr.bf16.mxu0 %v853
    %1164 = vmatpush1.bf16.msra.mxu0 %v852
    %1165 = vmatprep.subr.bf16.mxu0 %v857
    %1166 = vmatpush1.bf16.msra.mxu0 %v856
    %1167 = vmatprep.subr.bf16.mxu0 %v861
    %1168 = vmatpush1.bf16.msra.mxu0 %v860
    %1169 = vmatprep.subr.bf16.mxu0 %v865
    %1170 = vmatpush1.bf16.msra.mxu0 %v864
    %1171 = vmatprep.subr.bf16.mxu0 %v869
    %1172 = vmatpush1.bf16.msra.mxu0 %v868
    %1173 = vmatprep.subr.bf16.mxu0 %v873
    %1174 = vmatpush1.bf16.msra.mxu0 %v872
    %1175 = vmatprep.subr.bf16.mxu0 %v877
    %1176 = vmatpush1.bf16.msra.mxu0 %v876
    %1177 = vmatprep.subr.bf16.mxu0 %v881
    %1178 = vmatpush1.bf16.msra.mxu0 %v880
    %1179 = vmatprep.subr.bf16.mxu0 %v885
    %1180 = vmatpush1.bf16.msra.mxu0 %v884
    %1181 = vmatprep.subr.bf16.mxu0 %v889
    %1182 = vmatpush1.bf16.msra.mxu0 %v888
    %1183 = vmatprep.subr.bf16.mxu0 %v893
    %1184 = vmatpush1.bf16.msra.mxu0 %v892
    %1185 = vmatprep.subr.bf16.mxu0 %v897
    %1186 = vmatpush1.bf16.msra.mxu0 %v896
    %1187 = vmatprep.subr.bf16.mxu0 %v901
    %1188 = vmatpush1.bf16.msra.mxu0 %v900
    %1189 = vmatprep.subr.bf16.mxu0 %v905
    %1190 = vmatpush1.bf16.msra.mxu0 %v904
    %1191 = vmatprep.subr.bf16.mxu0 %v909
    %1192 = vmatpush1.bf16.msra.mxu0 %v908
    %1193 = vmatprep.mubr.bf16.mxu0 %v247
    %1194 = vmatmul.mubr.bf16.gmra.mrb[0].mxu0 %v246
    %v1195 = vpop.f32.mrb[0].mxu0
    %v1196 = vadd.f32 %v1155, %v1195
    %v1197 = vpop.f32.mrb[0].mxu0
    %v1198 = vadd.f32 %v1157, %v1197
    %v1199 = vpop.f32.mrb[0].mxu0
    %v1200 = vpop.f32.mrb[0].mxu0
    %1201 = vdwg.mxu0
    %v1202 = vmax.f32 %v1114, 0.0
    %v1203 = vmax.f32 %v1116, 0.0
    %v1204 = vmax.f32 %v1196, 0.0
    %v1205 = vmax.f32 %v1198, 0.0
    %v1206 = vpack.c.bf16 %v1202, %v1202
    %v1207 = vpack.c.bf16 %v1203, %v1203
    %v1208 = vpack.c.bf16 %v1204, %v1204
    %v1209 = vpack.c.bf16 %v1205, %v1205
    %v1210 = vld [vmem:[#allocation10] sm:$0xf]
    %v1211 = vld [vmem:[#allocation10 + $0x4] sm:$0xf]
    %v1212 = vld [vmem:[#allocation10 + $0x8] sm:$0xf]
    %v1213 = vld [vmem:[#allocation10 + $0xc] sm:$0xf]
    %v1214 = vld [vmem:[#allocation10 + $0x10] sm:$0xf]
    %v1215 = vld [vmem:[#allocation10 + $0x14] sm:$0xf]
    %v1216 = vld [vmem:[#allocation10 + $0x18] sm:$0xf]
    %v1217 = vld [vmem:[#allocation10 + $0x1c] sm:$0xf]
    %v1218 = vld [vmem:[#allocation10 + $0x20] sm:$0xf]
    %v1219 = vld [vmem:[#allocation10 + $0x24] sm:$0xf]
    %v1220 = vld [vmem:[#allocation10 + $0x28] sm:$0xf]
    %v1221 = vld [vmem:[#allocation10 + $0x2c] sm:$0xf]
    %v1222 = vld [vmem:[#allocation10 + $0x30] sm:$0xf]
    %v1223 = vld [vmem:[#allocation10 + $0x34] sm:$0xf]
    %v1224 = vld [vmem:[#allocation10 + $0x38] sm:$0xf]
    %v1225 = vld [vmem:[#allocation10 + $0x3c] sm:$0xf]
    %v1226 = vld [vmem:[#allocation10 + $0x40] sm:$0xf]
    %v1227 = vld [vmem:[#allocation10 + $0x44] sm:$0xf]
    %v1228 = vld [vmem:[#allocation10 + $0x48] sm:$0xf]
    %v1229 = vld [vmem:[#allocation10 + $0x4c] sm:$0xf]
    %v1230 = vld [vmem:[#allocation10 + $0x50] sm:$0xf]
    %v1231 = vld [vmem:[#allocation10 + $0x54] sm:$0xf]
    %v1232 = vld [vmem:[#allocation10 + $0x58] sm:$0xf]
    %v1233 = vld [vmem:[#allocation10 + $0x5c] sm:$0xf]
    %v1234 = vld [vmem:[#allocation10 + $0x60] sm:$0xf]
    %v1235 = vld [vmem:[#allocation10 + $0x64] sm:$0xf]
    %v1236 = vld [vmem:[#allocation10 + $0x68] sm:$0xf]
    %v1237 = vld [vmem:[#allocation10 + $0x6c] sm:$0xf]
    %v1238 = vld [vmem:[#allocation10 + $0x70] sm:$0xf]
    %v1239 = vld [vmem:[#allocation10 + $0x74] sm:$0xf]
    %v1240 = vld [vmem:[#allocation10 + $0x78] sm:$0xf]
    %v1241 = vld [vmem:[#allocation10 + $0x7c] sm:$0xf]
    %v1242 = vld [vmem:[#allocation10 + $0x80] sm:$0xf]
    %v1243 = vld [vmem:[#allocation10 + $0x84] sm:$0xf]
    %v1244 = vld [vmem:[#allocation10 + $0x88] sm:$0xf]
    %v1245 = vld [vmem:[#allocation10 + $0x8c] sm:$0xf]
    %v1246 = vld [vmem:[#allocation10 + $0x90] sm:$0xf]
    %v1247 = vld [vmem:[#allocation10 + $0x94] sm:$0xf]
    %v1248 = vld [vmem:[#allocation10 + $0x98] sm:$0xf]
    %v1249 = vld [vmem:[#allocation10 + $0x9c] sm:$0xf]
    %v1250 = vld [vmem:[#allocation10 + $0xa0] sm:$0xf]
    %v1251 = vld [vmem:[#allocation10 + $0xa4] sm:$0xf]
    %v1252 = vld [vmem:[#allocation10 + $0xa8] sm:$0xf]
    %v1253 = vld [vmem:[#allocation10 + $0xac] sm:$0xf]
    %v1254 = vld [vmem:[#allocation10 + $0xb0] sm:$0xf]
    %v1255 = vld [vmem:[#allocation10 + $0xb4] sm:$0xf]
    %v1256 = vld [vmem:[#allocation10 + $0xb8] sm:$0xf]
    %v1257 = vld [vmem:[#allocation10 + $0xbc] sm:$0xf]
    %v1258 = vld [vmem:[#allocation10 + $0xc0] sm:$0xf]
    %v1259 = vld [vmem:[#allocation10 + $0xc4] sm:$0xf]
    %v1260 = vld [vmem:[#allocation10 + $0xc8] sm:$0xf]
    %v1261 = vld [vmem:[#allocation10 + $0xcc] sm:$0xf]
    %v1262 = vld [vmem:[#allocation10 + $0xd0] sm:$0xf]
    %v1263 = vld [vmem:[#allocation10 + $0xd4] sm:$0xf]
    %v1264 = vld [vmem:[#allocation10 + $0xd8] sm:$0xf]
    %v1265 = vld [vmem:[#allocation10 + $0xdc] sm:$0xf]
    %v1266 = vld [vmem:[#allocation10 + $0xe0] sm:$0xf]
    %v1267 = vld [vmem:[#allocation10 + $0xe4] sm:$0xf]
    %v1268 = vld [vmem:[#allocation10 + $0xe8] sm:$0xf]
    %v1269 = vld [vmem:[#allocation10 + $0xec] sm:$0xf]
    %v1270 = vld [vmem:[#allocation10 + $0xf0] sm:$0xf]
    %v1271 = vld [vmem:[#allocation10 + $0xf4] sm:$0xf]
    %v1272 = vld [vmem:[#allocation10 + $0xf8] sm:$0xf]
    %v1273 = vld [vmem:[#allocation10 + $0xfc] sm:$0xf]
    %v1274 = vld [vmem:[%s7] sm:$0x1]
    %v1276 = vlaneseq
    %v1277 = vshrl.u32 %v1276, 7
    %v1278 = vsub.s32 0, %v1277
    %v1279 = vrot.slane %v1274, %v1278
    %v1345 = vunpack.c.l.b16 %v1210
    %v1346 = vunpack.c.l.b16 %v1211
    %v1347 = vunpack.c.l.b16 %v1212
    %v1348 = vunpack.c.l.b16 %v1213
    %v1349 = vunpack.c.l.b16 %v1214
    %v1350 = vunpack.c.l.b16 %v1215
    %v1351 = vunpack.c.l.b16 %v1216
    %v1352 = vunpack.c.l.b16 %v1217
    %v1353 = vunpack.c.l.b16 %v1218
    %v1354 = vunpack.c.l.b16 %v1219
    %v1355 = vunpack.c.l.b16 %v1220
    %v1356 = vunpack.c.l.b16 %v1221
    %v1357 = vunpack.c.l.b16 %v1222
    %v1358 = vunpack.c.l.b16 %v1223
    %v1359 = vunpack.c.l.b16 %v1224
    %v1360 = vunpack.c.l.b16 %v1225
    %v1361 = vunpack.c.l.b16 %v1226
    %v1362 = vunpack.c.l.b16 %v1227
    %v1363 = vunpack.c.l.b16 %v1228
    %v1364 = vunpack.c.l.b16 %v1229
    %v1365 = vunpack.c.l.b16 %v1230
    %v1366 = vunpack.c.l.b16 %v1231
    %v1367 = vunpack.c.l.b16 %v1232
    %v1368 = vunpack.c.l.b16 %v1233
    %v1369 = vunpack.c.l.b16 %v1234
    %v1370 = vunpack.c.l.b16 %v1235
    %v1371 = vunpack.c.l.b16 %v1236
    %v1372 = vunpack.c.l.b16 %v1237
    %v1373 = vunpack.c.l.b16 %v1238
    %v1374 = vunpack.c.l.b16 %v1239
    %v1375 = vunpack.c.l.b16 %v1240
    %v1376 = vunpack.c.l.b16 %v1241
    %v1377 = vunpack.c.l.b16 %v1242
    %v1378 = vunpack.c.l.b16 %v1243
    %v1379 = vunpack.c.l.b16 %v1244
    %v1380 = vunpack.c.l.b16 %v1245
    %v1381 = vunpack.c.l.b16 %v1246
    %v1382 = vunpack.c.l.b16 %v1247
    %v1383 = vunpack.c.l.b16 %v1248
    %v1384 = vunpack.c.l.b16 %v1249
    %v1385 = vunpack.c.l.b16 %v1250
    %v1386 = vunpack.c.l.b16 %v1251
    %v1387 = vunpack.c.l.b16 %v1252
    %v1388 = vunpack.c.l.b16 %v1253
    %v1389 = vunpack.c.l.b16 %v1254
    %v1390 = vunpack.c.l.b16 %v1255
    %v1391 = vunpack.c.l.b16 %v1256
    %v1392 = vunpack.c.l.b16 %v1257
    %v1393 = vunpack.c.l.b16 %v1258
    %v1394 = vunpack.c.l.b16 %v1259
    %v1395 = vunpack.c.l.b16 %v1260
    %v1396 = vunpack.c.l.b16 %v1261
    %v1397 = vunpack.c.l.b16 %v1262
    %v1398 = vunpack.c.l.b16 %v1263
    %v1399 = vunpack.c.l.b16 %v1264
    %v1400 = vunpack.c.l.b16 %v1265
    %v1401 = vunpack.c.l.b16 %v1266
    %v1402 = vunpack.c.l.b16 %v1267
    %v1403 = vunpack.c.l.b16 %v1268
    %v1404 = vunpack.c.l.b16 %v1269
    %v1405 = vunpack.c.l.b16 %v1270
    %v1406 = vunpack.c.l.b16 %v1271
    %v1407 = vunpack.c.l.b16 %v1272
    %v1408 = vunpack.c.l.b16 %v1273
    %v1409 = vpack.c.b16 %v1346, %v1345
    %v1410 = vpack.c.b16 %v1348, %v1347
    %v1411 = vpack.c.b16 %v1350, %v1349
    %v1412 = vpack.c.b16 %v1352, %v1351
    %v1413 = vpack.c.b16 %v1354, %v1353
    %v1414 = vpack.c.b16 %v1356, %v1355
    %v1415 = vpack.c.b16 %v1358, %v1357
    %v1416 = vpack.c.b16 %v1360, %v1359
    %v1417 = vpack.c.b16 %v1362, %v1361
    %v1418 = vpack.c.b16 %v1364, %v1363
    %v1419 = vpack.c.b16 %v1366, %v1365
    %v1420 = vpack.c.b16 %v1368, %v1367
    %v1421 = vpack.c.b16 %v1370, %v1369
    %v1422 = vpack.c.b16 %v1372, %v1371
    %v1423 = vpack.c.b16 %v1374, %v1373
    %v1424 = vpack.c.b16 %v1376, %v1375
    %v1425 = vpack.c.b16 %v1378, %v1377
    %v1426 = vpack.c.b16 %v1380, %v1379
    %v1427 = vpack.c.b16 %v1382, %v1381
    %v1428 = vpack.c.b16 %v1384, %v1383
    %v1429 = vpack.c.b16 %v1386, %v1385
    %v1430 = vpack.c.b16 %v1388, %v1387
    %v1431 = vpack.c.b16 %v1390, %v1389
    %v1432 = vpack.c.b16 %v1392, %v1391
    %v1433 = vpack.c.b16 %v1394, %v1393
    %v1434 = vpack.c.b16 %v1396, %v1395
    %v1435 = vpack.c.b16 %v1398, %v1397
    %v1436 = vpack.c.b16 %v1400, %v1399
    %v1437 = vpack.c.b16 %v1402, %v1401
    %v1438 = vpack.c.b16 %v1404, %v1403
    %v1439 = vpack.c.b16 %v1406, %v1405
    %v1440 = vpack.c.b16 %v1408, %v1407
    %1473 = vmatprep.subr.bf16.mxu0 0
    %1474 = vmatpush1.bf16.msra.mxu0 %v1409
    %1475 = vmatprep.subr.bf16.mxu0 0
    %1476 = vmatpush1.bf16.msra.mxu0 %v1410
    %1477 = vmatprep.subr.bf16.mxu0 0
    %1478 = vmatpush1.bf16.msra.mxu0 %v1411
    %1479 = vmatprep.subr.bf16.mxu0 0
    %1480 = vmatpush1.bf16.msra.mxu0 %v1412
    %1481 = vmatprep.subr.bf16.mxu0 0
    %1482 = vmatpush1.bf16.msra.mxu0 %v1413
    %1483 = vmatprep.subr.bf16.mxu0 0
    %1484 = vmatpush1.bf16.msra.mxu0 %v1414
    %1485 = vmatprep.subr.bf16.mxu0 0
    %1486 = vmatpush1.bf16.msra.mxu0 %v1415
    %1487 = vmatprep.subr.bf16.mxu0 0
    %1488 = vmatpush1.bf16.msra.mxu0 %v1416
    %1489 = vmatprep.subr.bf16.mxu0 0
    %1490 = vmatpush1.bf16.msra.mxu0 %v1417
    %1491 = vmatprep.subr.bf16.mxu0 0
    %1492 = vmatpush1.bf16.msra.mxu0 %v1418
    %1493 = vmatprep.subr.bf16.mxu0 0
    %1494 = vmatpush1.bf16.msra.mxu0 %v1419
    %1495 = vmatprep.subr.bf16.mxu0 0
    %1496 = vmatpush1.bf16.msra.mxu0 %v1420
    %1497 = vmatprep.subr.bf16.mxu0 0
    %1498 = vmatpush1.bf16.msra.mxu0 %v1421
    %1499 = vmatprep.subr.bf16.mxu0 0
    %1500 = vmatpush1.bf16.msra.mxu0 %v1422
    %1501 = vmatprep.subr.bf16.mxu0 0
    %1502 = vmatpush1.bf16.msra.mxu0 %v1423
    %1503 = vmatprep.subr.bf16.mxu0 0
    %1504 = vmatpush1.bf16.msra.mxu0 %v1424
    %1505 = vmatprep.mubr.bf16.mxu0 %v1207
    %1506 = vmatmul.mubr.bf16.gmra.mrb[0].mxu0 %v1206
    %v1507 = vpop.f32.mrb[0].mxu0
    %v1508 = vadd.f32 %v1279, %v1507
    %v1509 = vpop.f32.mrb[0].mxu0
    %v1510 = vpop.f32.mrb[0].mxu0
    %v1511 = vpop.f32.mrb[0].mxu0
    %1512 = vdwg.mxu0
    %1513 = vmatprep.subr.bf16.mxu0 0
    %1514 = vmatpush1.bf16.msra.mxu0 %v1425
    %1515 = vmatprep.subr.bf16.mxu0 0
    %1516 = vmatpush1.bf16.msra.mxu0 %v1426
    %1517 = vmatprep.subr.bf16.mxu0 0
    %1518 = vmatpush1.bf16.msra.mxu0 %v1427
    %1519 = vmatprep.subr.bf16.mxu0 0
    %1520 = vmatpush1.bf16.msra.mxu0 %v1428
    %1521 = vmatprep.subr.bf16.mxu0 0
    %1522 = vmatpush1.bf16.msra.mxu0 %v1429
    %1523 = vmatprep.subr.bf16.mxu0 0
    %1524 = vmatpush1.bf16.msra.mxu0 %v1430
    %1525 = vmatprep.subr.bf16.mxu0 0
    %1526 = vmatpush1.bf16.msra.mxu0 %v1431
    %1527 = vmatprep.subr.bf16.mxu0 0
    %1528 = vmatpush1.bf16.msra.mxu0 %v1432
    %1529 = vmatprep.subr.bf16.mxu0 0
    %1530 = vmatpush1.bf16.msra.mxu0 %v1433
    %1531 = vmatprep.subr.bf16.mxu0 0
    %1532 = vmatpush1.bf16.msra.mxu0 %v1434
    %1533 = vmatprep.subr.bf16.mxu0 0
    %1534 = vmatpush1.bf16.msra.mxu0 %v1435
    %1535 = vmatprep.subr.bf16.mxu0 0
    %1536 = vmatpush1.bf16.msra.mxu0 %v1436
    %1537 = vmatprep.subr.bf16.mxu0 0
    %1538 = vmatpush1.bf16.msra.mxu0 %v1437
    %1539 = vmatprep.subr.bf16.mxu0 0
    %1540 = vmatpush1.bf16.msra.mxu0 %v1438
    %1541 = vmatprep.subr.bf16.mxu0 0
    %1542 = vmatpush1.bf16.msra.mxu0 %v1439
    %1543 = vmatprep.subr.bf16.mxu0 0
    %1544 = vmatpush1.bf16.msra.mxu0 %v1440
    %1545 = vmatprep.mubr.bf16.mxu0 %v1209
    %1546 = vmatmul.mubr.bf16.gmra.mrb[0].mxu0 %v1208
    %v1547 = vpop.f32.mrb[0].mxu0
    %v1548 = vadd.f32 %v1508, %v1547
    %v1549 = vpop.f32.mrb[0].mxu0
    %v1550 = vpop.f32.mrb[0].mxu0
    %v1551 = vpop.f32.mrb[0].mxu0
    %1552 = vdwg.mxu0
    %v1553 = vlaneseq
    %v1554 = vand.u32 %v1553, 127
    %vm1555 = vcmp.eq.s32.totalorder %v1554, 0
    %v1556 = vmul.f32 %v1548, 0.5
    %v1557 = vsel %vm1555, %v1556, %v1548
    %v1558 = vtanh.pop %v1557
    %v1559 = vmul.f32 %v1558, 0.5
    %v1560 = vadd.f32 %v1559, 0.5
    %v1561 = vstv %s95
    %v1562 = vmul.f32 %v1560, %v1561
    %vm1563 = vcmp.eq.s32.totalorder %v1554, 1
    %v1564 = vstv %s96
    %v1565 = vmul.f32 %v1558, %v1564
    %v1566 = vsel %vm1563, %v1565, %v1548
    %v1567 = vsel %vm1555, %v1562, %v1566
    %v1568 = vpack.c.bf16 %v1567, %v1567
    %1569 = vst [vmem:[#allocation12] sm:$0xf] %v1568
    // Predicated region
    $region54: #{tpu_custom_call.1} parent=1 // pred_check
      _
    $region55: #{tpu_custom_call.1} parent=1 // pred_check_branch
      %1571 = sbr.rel (0) target = $region57
    $region56: #{tpu_custom_call.1} parent=1 // pred_region
      %s1573 = ssub.s32 64, 64
      %1574 = vsyncadd [#allocation4], %s1573
      %s1576 = sshll.u32 [#allocation12], 4
      %s1577 = int_to_ptr.vmem [resolvable:$true] %s1576
      %1579 = dma.vmem_to_hbm [thread:$0]  %s1577, 64, %s8, [#allocation4]
    $region57: #{tpu_custom_call.1} parent=1 // pred_fallthru
      _
    // Predicated region
    $region58: #{tpu_custom_call.1} parent=1 // pred_check
      _
    $region59: #{tpu_custom_call.1} parent=1 // pred_check_branch
      %1581 = sbr.rel (0) target = $region61
    $region60: #{tpu_custom_call.1} parent=1 // pred_region
      %1582 = dma.done [#allocation4], 64
    $region61: #{tpu_custom_call.1} parent=1 // pred_fallthru
      _
    %1583 = vsyncpa [#allocation3], 1
    %1584 = vsyncpa [#allocation8], 1
    %1585 = vsyncpa [#allocation11], 1
    %1586 = vsyncpa [#allocation4], 1
    %1587 = vsyncpa [#allocation5], 1

</llo_original>
